<compile_context>
chip_gen: v5e
topology: v5e:2x2
jax: 0.10.0
libtpu: 0.0.40
codegen_flags: <defaults>
</compile_context>

<pallas_src>
import functools

import jax
import jax.numpy as jnp
from jax.experimental import pallas as pl


# ----------------------------- Pallas kernel ------------------------------ #
def lstm_kernel(x2d_ref,      # (S*Bp, I)  time-major rows: row = t*Bp + b
                wih0_ref,     # (I, 4H)
                whh_cat_ref,  # (H, 8H)    [whh0 | whh1] side by side
                b0_ref,       # (1, 4H)    b_ih0 + b_hh0
                wih1_ref,     # (H, 4H)
                b1_ref,       # (1, 4H)    b_ih1 + b_hh1
                fcw_ref,      # (H, 128)   fc weight, lane-padded with zeros
                fcb_ref,      # (1, 1)     fc bias
                out_ref,      # (Bp, 128)  lane-dense output; col 0 = fc(h1_T)
                *, seq_len, batch_pad, hidden):
    S, B, H = seq_len, batch_pad, hidden

    # Layer-0 input projection for ALL time steps at once (off the recurrence):
    # one (S*Bp, I) @ (I, 4H) MXU matmul instead of S tiny matmuls on the chain.
    x_proj = (jnp.dot(x2d_ref[...], wih0_ref[...],
                      preferred_element_type=jnp.float32)
              + b0_ref[...])                                    # (S*Bp, 4H)

    # Weights loaded once, resident for the whole unrolled loop.
    whh_cat = whh_cat_ref[...]                                  # (H, 8H)
    wih1 = wih1_ref[...]                                        # (H, 4H)

    # Hoisted activation constants (computed once, outside the loop):
    #   sigmoid lanes: 0.5 * tanh(0.5 * x) + 0.5 ; "g" lanes: tanh(x).
    lane = jax.lax.broadcasted_iota(jnp.int32, (B, 4 * H), 1)
    is_tanh = (lane >= 2 * H) & (lane < 3 * H)
    pre_s = jnp.where(is_tanh, 1.0, 0.5).astype(jnp.float32)    # (B, 4H)
    post_a = pre_s                                              # same values
    post_b = jnp.where(is_tanh, 0.0, 0.5).astype(jnp.float32)   # (B, 4H)
    # Layer-1 bias broadcast hoisted out of the loop and pre-scaled by pre_s
    # so the per-step bias add fuses into the pre-tanh FMA.
    pre_b1 = pre_s * jnp.broadcast_to(b1_ref[...], (B, 4 * H))  # (B, 4H)

    def cell(gates_scaled, c):
        # gates_scaled = pre_s * raw_gates (+ pre-scaled bias).
        t = jnp.tanh(gates_scaled)          # single EUP transcendental
        act = post_a * t + post_b           # i,f,o -> sigmoid ; g -> tanh
        i_g = act[:, 0:H]
        f_g = act[:, H:2 * H]
        g_g = act[:, 2 * H:3 * H]
        o_g = act[:, 3 * H:4 * H]
        c_new = f_g * c + i_g * g_g
        h_new = o_g * jnp.tanh(c_new)
        return h_new, c_new

    zeros = jnp.zeros((B, H), jnp.float32)
    h0, c0, h1, c1 = zeros, zeros, zeros, zeros

    # Fully unrolled recurrence (S small and static); h/c stay in vregs,
    # no VMEM round-trips between steps.
    for t in range(S):
        # Both recurrent matmuls in ONE MXU op:
        #   [h0_prev; h1_prev] (2Bp, H) @ [whh0 | whh1] (H, 8H) -> (2Bp, 8H)
        # then take the 8/128-aligned (rows, gate-cols) quadrants.  The two
        # unused cross quadrants are free (K and rows << MXU dims).
        hh = jnp.concatenate([h0, h1], axis=0)                  # (2Bp, H)
        rec = jnp.dot(hh, whh_cat, preferred_element_type=jnp.float32)
        rec0 = rec[0:B, 0:4 * H]            # h0_prev @ whh0
        rec1 = rec[B:2 * B, 4 * H:8 * H]    # h1_prev @ whh1

        # ---- layer 0: whole-tile (8-aligned) slice of the hoisted projection.
        g0 = x_proj[t * B:(t + 1) * B, :] + rec0
        h0, c0 = cell(pre_s * g0, c0)

        # ---- layer 1: only the h0_new @ W_ih1 dot remains as a second MXU op
        # on the serial chain (it depends on this step's h0).
        g1 = jnp.dot(h0, wih1, preferred_element_type=jnp.float32) + rec1
        h1, c1 = cell(pre_s * g1 + pre_b1, c1)

    # Fused fc epilogue: Linear(H, 1) against lane-padded fcw -> lane-dense
    # (Bp, 128) store (column 0 holds the real output).
    out_ref[...] = (jnp.dot(h1, fcw_ref[...],
                            preferred_element_type=jnp.float32)
                    + fcb_ref[...])


# ------------------------------ JAX wrapper -------------------------------- #
def lstm_model_forward(x, params):
    """x: (batch, seq, input) float32  ->  (batch, 1) float32 = fc(hidden[-1])."""
    B, S, I = x.shape
    H = params["whh0"].shape[0]
    Bp = max(8, ((B + 7) // 8) * 8)   # pad batch to the sublane width

    # Time-major, batch-padded (zero rows), flattened so the layer-0 input
    # projection is one matmul and per-step slices are whole-tile views.
    x_t = jnp.transpose(x, (1, 0, 2))                      # (S, B, I)
    if Bp != B:
        x_t = jnp.pad(x_t, ((0, 0), (0, Bp - B), (0, 0)))  # (S, Bp, I)
    x2d = x_t.reshape(S * Bp, I)

    # Weight prep (in practice done once at parameter-load time):
    #   recurrent weights side by side -> one fused MXU op per step,
    #   fc weight lane-padded to 128 -> lane-dense kernel output store.
    whh_cat = jnp.concatenate([params["whh0"], params["whh1"]], axis=1)  # (H,8H)
    fcw_pad = jnp.pad(params["fcw"], ((0, 0), (0, 128 - params["fcw"].shape[1])))

    kernel = functools.partial(lstm_kernel, seq_len=S, batch_pad=Bp, hidden=H)

    # Grid-less call: all operands (a few KB) are resident in VMEM and the
    # whole sequence + fc epilogue run in a single kernel invocation.
    out_pad = pl.pallas_call(
        kernel,
        out_shape=jax.ShapeDtypeStruct((Bp, 128), jnp.float32),
    )(x2d, params["wih0"], whh_cat, params["b0"],
      params["wih1"], params["b1"], fcw_pad, params["fcb"])

    # Drop padded batch rows and the padded fc lanes.
    return out_pad[:B, 0:1]


# --------------------------- pure-JAX reference ---------------------------- #
def lstm_model_reference(x, params):
    B, S, I = x.shape
    H = params["whh0"].shape[0]

    def cell(x_in, h, c, wih, whh, b):
        gates = x_in @ wih + h @ whh + b
        i_g = jax.nn.sigmoid(gates[:, 0:H])
        f_g = jax.nn.sigmoid(gates[:, H:2 * H])
        g_g = jnp.tanh(gates[:, 2 * H:3 * H])
        o_g = jax.nn.sigmoid(gates[:, 3 * H:4 * H])
        c_new = f_g * c + i_g * g_g
        h_new = o_g * jnp.tanh(c_new)
        return h_new, c_new

    def step(carry, x_t):
        h0, c0, h1, c1 = carry
        h0, c0 = cell(x_t, h0, c0, params["wih0"], params["whh0"], params["b0"])
        h1, c1 = cell(h0, h1, c1, params["wih1"], params["whh1"], params["b1"])
        return (h0, c0, h1, c1), None

    z = jnp.zeros((B, H), jnp.float32)
    (h0, c0, h1, c1), _ = jax.lax.scan(step, (z, z, z, z),
                                       jnp.transpose(x, (1, 0, 2)))
    return h1 @ params["fcw"] + params["fcb"]


# --------------------------------- main ------------------------------------ #
if __name__ == "__main__":
    # Small shapes consistent with the module's forward:
    # x: (batch, seq, input_size), hidden_size H, num_layers=2, output_size=1
    B, S, I, H = 2, 8, 16, 32

    key = jax.random.PRNGKey(0)
    ks = jax.random.split(key, 11)
    bound = 1.0 / jnp.sqrt(H)  # PyTorch default uniform(-1/sqrt(H), 1/sqrt(H))
    u = lambda k, shape: jax.random.uniform(k, shape, jnp.float32, -bound, bound)

    # Weights stored pre-transposed: (in_dim, 4H); biases summed (b_ih + b_hh).
    params = {
        "wih0": u(ks[0], (I, 4 * H)),
        "whh0": u(ks[1], (H, 4 * H)),
        "b0":   u(ks[2], (1, 4 * H)) + u(ks[3], (1, 4 * H)),
        "wih1": u(ks[4], (H, 4 * H)),
        "whh1": u(ks[5], (H, 4 * H)),
        "b1":   u(ks[6], (1, 4 * H)) + u(ks[7], (1, 4 * H)),
        "fcw":  u(ks[8], (H, 1)),
        "fcb":  u(ks[9], (1, 1)),
    }

    x = jax.random.normal(ks[10], (B, S, I), jnp.float32)

    out = lstm_model_forward(x, params)
    out = jax.block_until_ready(out)

    ref = lstm_model_reference(x, params)
    assert out.shape == (B, 1)
    assert jnp.allclose(out, ref, atol=2e-4, rtol=2e-4), (out, ref)

    print("KERNEL_OK")
</pallas_src>

<mosaic_0001>
module attributes {stable_mosaic.version = 11 : i64} {
  func.func @lstm_kernel(%arg0: memref<64x16xf32, #tpu.memory_space<vmem>>, %arg1: memref<16x128xf32, #tpu.memory_space<vmem>>, %arg2: memref<32x256xf32, #tpu.memory_space<vmem>>, %arg3: memref<1x128xf32, #tpu.memory_space<vmem>>, %arg4: memref<32x128xf32, #tpu.memory_space<vmem>>, %arg5: memref<1x128xf32, #tpu.memory_space<vmem>>, %arg6: memref<32x128xf32, #tpu.memory_space<vmem>>, %arg7: memref<1x1xf32, #tpu.memory_space<vmem>>, %arg8: memref<8x128xf32, #tpu.memory_space<vmem>>) attributes {dimension_semantics = [], scalar_prefetch = 0 : i64, scratch_operands = 0 : i64, tpu.core_type = #tpu.core_type<tc>} {
    %c0 = arith.constant 0 : index
    %c0_0 = arith.constant 0 : index
    %0 = vector.load %arg0[%c0, %c0_0] : memref<64x16xf32, #tpu.memory_space<vmem>>, vector<64x16xf32>
    %c0_1 = arith.constant 0 : index
    %c0_2 = arith.constant 0 : index
    %1 = vector.load %arg1[%c0_1, %c0_2] : memref<16x128xf32, #tpu.memory_space<vmem>>, vector<16x128xf32>
    %cst = arith.constant dense<0.000000e+00> : vector<64x128xf32>
    %2 = tpu.matmul %0, %1, %cst {dimension_numbers = #tpu.dot_dimension_numbers<[1], [0], [0], [1], [0, 0, 1, 1], [], []>} : vector<64x16xf32>, vector<16x128xf32>, vector<64x128xf32> -> vector<64x128xf32>
    %c0_3 = arith.constant 0 : index
    %c0_4 = arith.constant 0 : index
    %3 = vector.load %arg3[%c0_3, %c0_4] : memref<1x128xf32, #tpu.memory_space<vmem>>, vector<1x128xf32>
    %4 = vector.broadcast %3 : vector<1x128xf32> to vector<64x128xf32>
    %5 = arith.addf %2, %4 : vector<64x128xf32>
    %c0_5 = arith.constant 0 : index
    %c0_6 = arith.constant 0 : index
    %6 = vector.load %arg2[%c0_5, %c0_6] : memref<32x256xf32, #tpu.memory_space<vmem>>, vector<32x256xf32>
    %c0_7 = arith.constant 0 : index
    %c0_8 = arith.constant 0 : index
    %7 = vector.load %arg4[%c0_7, %c0_8] : memref<32x128xf32, #tpu.memory_space<vmem>>, vector<32x128xf32>
    %8 = tpu.iota {dimensions = array<i32: 1>} : vector<8x128xi32>
    %c64_i32 = arith.constant 64 : i32
    %9 = vector.broadcast %c64_i32 : i32 to vector<8x128xi32>
    %10 = arith.cmpi sge, %8, %9 : vector<8x128xi32>
    %c96_i32 = arith.constant 96 : i32
    %11 = vector.broadcast %c96_i32 : i32 to vector<8x128xi32>
    %12 = arith.cmpi slt, %8, %11 : vector<8x128xi32>
    %13 = arith.andi %10, %12 : vector<8x128xi1>
    %cst_9 = arith.constant 1.000000e+00 : f32
    %cst_10 = arith.constant 5.000000e-01 : f32
    %14 = vector.broadcast %cst_9 : f32 to vector<8x128xf32>
    %15 = vector.broadcast %cst_10 : f32 to vector<8x128xf32>
    %16 = arith.select %13, %14, %15 : vector<8x128xi1>, vector<8x128xf32>
    %cst_11 = arith.constant 0.000000e+00 : f32
    %cst_12 = arith.constant 5.000000e-01 : f32
    %17 = vector.broadcast %cst_11 : f32 to vector<8x128xf32>
    %18 = vector.broadcast %cst_12 : f32 to vector<8x128xf32>
    %19 = arith.select %13, %17, %18 : vector<8x128xi1>, vector<8x128xf32>
    %c0_13 = arith.constant 0 : index
    %c0_14 = arith.constant 0 : index
    %20 = vector.load %arg5[%c0_13, %c0_14] : memref<1x128xf32, #tpu.memory_space<vmem>>, vector<1x128xf32>
    %21 = vector.shape_cast %20 : vector<1x128xf32> to vector<1x128xf32>
    %22 = vector.broadcast %21 : vector<1x128xf32> to vector<8x128xf32>
    %23 = arith.mulf %16, %22 : vector<8x128xf32>
    %cst_15 = arith.constant 0.000000e+00 : f32
    %24 = vector.broadcast %cst_15 : f32 to vector<8x32xf32>
    %25 = tpu.concatenate %24, %24 in 0 : vector<8x32xf32>, vector<8x32xf32> -> vector<16x32xf32>
    %cst_16 = arith.constant dense<0.000000e+00> : vector<16x256xf32>
    %26 = tpu.matmul %25, %6, %cst_16 {dimension_numbers = #tpu.dot_dimension_numbers<[1], [0], [0], [1], [0, 0, 1, 1], [], []>} : vector<16x32xf32>, vector<32x256xf32>, vector<16x256xf32> -> vector<16x256xf32>
    %27 = vector.extract_strided_slice %26 {offsets = [0, 0], sizes = [8, 128], strides = [1, 1]} : vector<16x256xf32> to vector<8x128xf32>
    %28 = vector.extract_strided_slice %26 {offsets = [8, 128], sizes = [8, 128], strides = [1, 1]} : vector<16x256xf32> to vector<8x128xf32>
    %29 = vector.extract_strided_slice %5 {offsets = [0, 0], sizes = [8, 128], strides = [1, 1]} : vector<64x128xf32> to vector<8x128xf32>
    %30 = arith.addf %29, %27 : vector<8x128xf32>
    %31 = arith.mulf %16, %30 : vector<8x128xf32>
    %32 = math.tanh %31 : vector<8x128xf32>
    %33 = arith.mulf %16, %32 : vector<8x128xf32>
    %34 = arith.addf %33, %19 : vector<8x128xf32>
    %35 = vector.extract_strided_slice %34 {offsets = [0, 0], sizes = [8, 32], strides = [1, 1]} : vector<8x128xf32> to vector<8x32xf32>
    %36 = vector.extract_strided_slice %34 {offsets = [0, 32], sizes = [8, 32], strides = [1, 1]} : vector<8x128xf32> to vector<8x32xf32>
    %37 = vector.extract_strided_slice %34 {offsets = [0, 64], sizes = [8, 32], strides = [1, 1]} : vector<8x128xf32> to vector<8x32xf32>
    %38 = vector.extract_strided_slice %34 {offsets = [0, 96], sizes = [8, 32], strides = [1, 1]} : vector<8x128xf32> to vector<8x32xf32>
    %39 = arith.mulf %36, %24 : vector<8x32xf32>
    %40 = arith.mulf %35, %37 : vector<8x32xf32>
    %41 = arith.addf %39, %40 : vector<8x32xf32>
    %42 = math.tanh %41 : vector<8x32xf32>
    %43 = arith.mulf %38, %42 : vector<8x32xf32>
    %cst_17 = arith.constant dense<0.000000e+00> : vector<8x128xf32>
    %44 = tpu.matmul %43, %7, %cst_17 {dimension_numbers = #tpu.dot_dimension_numbers<[1], [0], [0], [1], [0, 0, 1, 1], [], []>} : vector<8x32xf32>, vector<32x128xf32>, vector<8x128xf32> -> vector<8x128xf32>
    %45 = arith.addf %44, %28 : vector<8x128xf32>
    %46 = arith.mulf %16, %45 : vector<8x128xf32>
    %47 = arith.addf %46, %23 : vector<8x128xf32>
    %48 = math.tanh %47 : vector<8x128xf32>
    %49 = arith.mulf %16, %48 : vector<8x128xf32>
    %50 = arith.addf %49, %19 : vector<8x128xf32>
    %51 = vector.extract_strided_slice %50 {offsets = [0, 0], sizes = [8, 32], strides = [1, 1]} : vector<8x128xf32> to vector<8x32xf32>
    %52 = vector.extract_strided_slice %50 {offsets = [0, 32], sizes = [8, 32], strides = [1, 1]} : vector<8x128xf32> to vector<8x32xf32>
    %53 = vector.extract_strided_slice %50 {offsets = [0, 64], sizes = [8, 32], strides = [1, 1]} : vector<8x128xf32> to vector<8x32xf32>
    %54 = vector.extract_strided_slice %50 {offsets = [0, 96], sizes = [8, 32], strides = [1, 1]} : vector<8x128xf32> to vector<8x32xf32>
    %55 = arith.mulf %52, %24 : vector<8x32xf32>
    %56 = arith.mulf %51, %53 : vector<8x32xf32>
    %57 = arith.addf %55, %56 : vector<8x32xf32>
    %58 = math.tanh %57 : vector<8x32xf32>
    %59 = arith.mulf %54, %58 : vector<8x32xf32>
    %60 = tpu.concatenate %43, %59 in 0 : vector<8x32xf32>, vector<8x32xf32> -> vector<16x32xf32>
    %cst_18 = arith.constant dense<0.000000e+00> : vector<16x256xf32>
    %61 = tpu.matmul %60, %6, %cst_18 {dimension_numbers = #tpu.dot_dimension_numbers<[1], [0], [0], [1], [0, 0, 1, 1], [], []>} : vector<16x32xf32>, vector<32x256xf32>, vector<16x256xf32> -> vector<16x256xf32>
    %62 = vector.extract_strided_slice %61 {offsets = [0, 0], sizes = [8, 128], strides = [1, 1]} : vector<16x256xf32> to vector<8x128xf32>
    %63 = vector.extract_strided_slice %61 {offsets = [8, 128], sizes = [8, 128], strides = [1, 1]} : vector<16x256xf32> to vector<8x128xf32>
    %64 = vector.extract_strided_slice %5 {offsets = [8, 0], sizes = [8, 128], strides = [1, 1]} : vector<64x128xf32> to vector<8x128xf32>
    %65 = arith.addf %64, %62 : vector<8x128xf32>
    %66 = arith.mulf %16, %65 : vector<8x128xf32>
    %67 = math.tanh %66 : vector<8x128xf32>
    %68 = arith.mulf %16, %67 : vector<8x128xf32>
    %69 = arith.addf %68, %19 : vector<8x128xf32>
    %70 = vector.extract_strided_slice %69 {offsets = [0, 0], sizes = [8, 32], strides = [1, 1]} : vector<8x128xf32> to vector<8x32xf32>
    %71 = vector.extract_strided_slice %69 {offsets = [0, 32], sizes = [8, 32], strides = [1, 1]} : vector<8x128xf32> to vector<8x32xf32>
    %72 = vector.extract_strided_slice %69 {offsets = [0, 64], sizes = [8, 32], strides = [1, 1]} : vector<8x128xf32> to vector<8x32xf32>
    %73 = vector.extract_strided_slice %69 {offsets = [0, 96], sizes = [8, 32], strides = [1, 1]} : vector<8x128xf32> to vector<8x32xf32>
    %74 = arith.mulf %71, %41 : vector<8x32xf32>
    %75 = arith.mulf %70, %72 : vector<8x32xf32>
    %76 = arith.addf %74, %75 : vector<8x32xf32>
    %77 = math.tanh %76 : vector<8x32xf32>
    %78 = arith.mulf %73, %77 : vector<8x32xf32>
    %cst_19 = arith.constant dense<0.000000e+00> : vector<8x128xf32>
    %79 = tpu.matmul %78, %7, %cst_19 {dimension_numbers = #tpu.dot_dimension_numbers<[1], [0], [0], [1], [0, 0, 1, 1], [], []>} : vector<8x32xf32>, vector<32x128xf32>, vector<8x128xf32> -> vector<8x128xf32>
    %80 = arith.addf %79, %63 : vector<8x128xf32>
    %81 = arith.mulf %16, %80 : vector<8x128xf32>
    %82 = arith.addf %81, %23 : vector<8x128xf32>
    %83 = math.tanh %82 : vector<8x128xf32>
    %84 = arith.mulf %16, %83 : vector<8x128xf32>
    %85 = arith.addf %84, %19 : vector<8x128xf32>
    %86 = vector.extract_strided_slice %85 {offsets = [0, 0], sizes = [8, 32], strides = [1, 1]} : vector<8x128xf32> to vector<8x32xf32>
    %87 = vector.extract_strided_slice %85 {offsets = [0, 32], sizes = [8, 32], strides = [1, 1]} : vector<8x128xf32> to vector<8x32xf32>
    %88 = vector.extract_strided_slice %85 {offsets = [0, 64], sizes = [8, 32], strides = [1, 1]} : vector<8x128xf32> to vector<8x32xf32>
    %89 = vector.extract_strided_slice %85 {offsets = [0, 96], sizes = [8, 32], strides = [1, 1]} : vector<8x128xf32> to vector<8x32xf32>
    %90 = arith.mulf %87, %57 : vector<8x32xf32>
    %91 = arith.mulf %86, %88 : vector<8x32xf32>
    %92 = arith.addf %90, %91 : vector<8x32xf32>
    %93 = math.tanh %92 : vector<8x32xf32>
    %94 = arith.mulf %89, %93 : vector<8x32xf32>
    %95 = tpu.concatenate %78, %94 in 0 : vector<8x32xf32>, vector<8x32xf32> -> vector<16x32xf32>
    %cst_20 = arith.constant dense<0.000000e+00> : vector<16x256xf32>
    %96 = tpu.matmul %95, %6, %cst_20 {dimension_numbers = #tpu.dot_dimension_numbers<[1], [0], [0], [1], [0, 0, 1, 1], [], []>} : vector<16x32xf32>, vector<32x256xf32>, vector<16x256xf32> -> vector<16x256xf32>
    %97 = vector.extract_strided_slice %96 {offsets = [0, 0], sizes = [8, 128], strides = [1, 1]} : vector<16x256xf32> to vector<8x128xf32>
    %98 = vector.extract_strided_slice %96 {offsets = [8, 128], sizes = [8, 128], strides = [1, 1]} : vector<16x256xf32> to vector<8x128xf32>
    %99 = vector.extract_strided_slice %5 {offsets = [16, 0], sizes = [8, 128], strides = [1, 1]} : vector<64x128xf32> to vector<8x128xf32>
    %100 = arith.addf %99, %97 : vector<8x128xf32>
    %101 = arith.mulf %16, %100 : vector<8x128xf32>
    %102 = math.tanh %101 : vector<8x128xf32>
    %103 = arith.mulf %16, %102 : vector<8x128xf32>
    %104 = arith.addf %103, %19 : vector<8x128xf32>
    %105 = vector.extract_strided_slice %104 {offsets = [0, 0], sizes = [8, 32], strides = [1, 1]} : vector<8x128xf32> to vector<8x32xf32>
    %106 = vector.extract_strided_slice %104 {offsets = [0, 32], sizes = [8, 32], strides = [1, 1]} : vector<8x128xf32> to vector<8x32xf32>
    %107 = vector.extract_strided_slice %104 {offsets = [0, 64], sizes = [8, 32], strides = [1, 1]} : vector<8x128xf32> to vector<8x32xf32>
    %108 = vector.extract_strided_slice %104 {offsets = [0, 96], sizes = [8, 32], strides = [1, 1]} : vector<8x128xf32> to vector<8x32xf32>
    %109 = arith.mulf %106, %76 : vector<8x32xf32>
    %110 = arith.mulf %105, %107 : vector<8x32xf32>
    %111 = arith.addf %109, %110 : vector<8x32xf32>
    %112 = math.tanh %111 : vector<8x32xf32>
    %113 = arith.mulf %108, %112 : vector<8x32xf32>
    %cst_21 = arith.constant dense<0.000000e+00> : vector<8x128xf32>
    %114 = tpu.matmul %113, %7, %cst_21 {dimension_numbers = #tpu.dot_dimension_numbers<[1], [0], [0], [1], [0, 0, 1, 1], [], []>} : vector<8x32xf32>, vector<32x128xf32>, vector<8x128xf32> -> vector<8x128xf32>
    %115 = arith.addf %114, %98 : vector<8x128xf32>
    %116 = arith.mulf %16, %115 : vector<8x128xf32>
    %117 = arith.addf %116, %23 : vector<8x128xf32>
    %118 = math.tanh %117 : vector<8x128xf32>
    %119 = arith.mulf %16, %118 : vector<8x128xf32>
    %120 = arith.addf %119, %19 : vector<8x128xf32>
    %121 = vector.extract_strided_slice %120 {offsets = [0, 0], sizes = [8, 32], strides = [1, 1]} : vector<8x128xf32> to vector<8x32xf32>
    %122 = vector.extract_strided_slice %120 {offsets = [0, 32], sizes = [8, 32], strides = [1, 1]} : vector<8x128xf32> to vector<8x32xf32>
    %123 = vector.extract_strided_slice %120 {offsets = [0, 64], sizes = [8, 32], strides = [1, 1]} : vector<8x128xf32> to vector<8x32xf32>
    %124 = vector.extract_strided_slice %120 {offsets = [0, 96], sizes = [8, 32], strides = [1, 1]} : vector<8x128xf32> to vector<8x32xf32>
    %125 = arith.mulf %122, %92 : vector<8x32xf32>
    %126 = arith.mulf %121, %123 : vector<8x32xf32>
    %127 = arith.addf %125, %126 : vector<8x32xf32>
    %128 = math.tanh %127 : vector<8x32xf32>
    %129 = arith.mulf %124, %128 : vector<8x32xf32>
    %130 = tpu.concatenate %113, %129 in 0 : vector<8x32xf32>, vector<8x32xf32> -> vector<16x32xf32>
    %cst_22 = arith.constant dense<0.000000e+00> : vector<16x256xf32>
    %131 = tpu.matmul %130, %6, %cst_22 {dimension_numbers = #tpu.dot_dimension_numbers<[1], [0], [0], [1], [0, 0, 1, 1], [], []>} : vector<16x32xf32>, vector<32x256xf32>, vector<16x256xf32> -> vector<16x256xf32>
    %132 = vector.extract_strided_slice %131 {offsets = [0, 0], sizes = [8, 128], strides = [1, 1]} : vector<16x256xf32> to vector<8x128xf32>
    %133 = vector.extract_strided_slice %131 {offsets = [8, 128], sizes = [8, 128], strides = [1, 1]} : vector<16x256xf32> to vector<8x128xf32>
    %134 = vector.extract_strided_slice %5 {offsets = [24, 0], sizes = [8, 128], strides = [1, 1]} : vector<64x128xf32> to vector<8x128xf32>
    %135 = arith.addf %134, %132 : vector<8x128xf32>
    %136 = arith.mulf %16, %135 : vector<8x128xf32>
    %137 = math.tanh %136 : vector<8x128xf32>
    %138 = arith.mulf %16, %137 : vector<8x128xf32>
    %139 = arith.addf %138, %19 : vector<8x128xf32>
    %140 = vector.extract_strided_slice %139 {offsets = [0, 0], sizes = [8, 32], strides = [1, 1]} : vector<8x128xf32> to vector<8x32xf32>
    %141 = vector.extract_strided_slice %139 {offsets = [0, 32], sizes = [8, 32], strides = [1, 1]} : vector<8x128xf32> to vector<8x32xf32>
    %142 = vector.extract_strided_slice %139 {offsets = [0, 64], sizes = [8, 32], strides = [1, 1]} : vector<8x128xf32> to vector<8x32xf32>
    %143 = vector.extract_strided_slice %139 {offsets = [0, 96], sizes = [8, 32], strides = [1, 1]} : vector<8x128xf32> to vector<8x32xf32>
    %144 = arith.mulf %141, %111 : vector<8x32xf32>
    %145 = arith.mulf %140, %142 : vector<8x32xf32>
    %146 = arith.addf %144, %145 : vector<8x32xf32>
    %147 = math.tanh %146 : vector<8x32xf32>
    %148 = arith.mulf %143, %147 : vector<8x32xf32>
    %cst_23 = arith.constant dense<0.000000e+00> : vector<8x128xf32>
    %149 = tpu.matmul %148, %7, %cst_23 {dimension_numbers = #tpu.dot_dimension_numbers<[1], [0], [0], [1], [0, 0, 1, 1], [], []>} : vector<8x32xf32>, vector<32x128xf32>, vector<8x128xf32> -> vector<8x128xf32>
    %150 = arith.addf %149, %133 : vector<8x128xf32>
    %151 = arith.mulf %16, %150 : vector<8x128xf32>
    %152 = arith.addf %151, %23 : vector<8x128xf32>
    %153 = math.tanh %152 : vector<8x128xf32>
    %154 = arith.mulf %16, %153 : vector<8x128xf32>
    %155 = arith.addf %154, %19 : vector<8x128xf32>
    %156 = vector.extract_strided_slice %155 {offsets = [0, 0], sizes = [8, 32], strides = [1, 1]} : vector<8x128xf32> to vector<8x32xf32>
    %157 = vector.extract_strided_slice %155 {offsets = [0, 32], sizes = [8, 32], strides = [1, 1]} : vector<8x128xf32> to vector<8x32xf32>
    %158 = vector.extract_strided_slice %155 {offsets = [0, 64], sizes = [8, 32], strides = [1, 1]} : vector<8x128xf32> to vector<8x32xf32>
    %159 = vector.extract_strided_slice %155 {offsets = [0, 96], sizes = [8, 32], strides = [1, 1]} : vector<8x128xf32> to vector<8x32xf32>
    %160 = arith.mulf %157, %127 : vector<8x32xf32>
    %161 = arith.mulf %156, %158 : vector<8x32xf32>
    %162 = arith.addf %160, %161 : vector<8x32xf32>
    %163 = math.tanh %162 : vector<8x32xf32>
    %164 = arith.mulf %159, %163 : vector<8x32xf32>
    %165 = tpu.concatenate %148, %164 in 0 : vector<8x32xf32>, vector<8x32xf32> -> vector<16x32xf32>
    %cst_24 = arith.constant dense<0.000000e+00> : vector<16x256xf32>
    %166 = tpu.matmul %165, %6, %cst_24 {dimension_numbers = #tpu.dot_dimension_numbers<[1], [0], [0], [1], [0, 0, 1, 1], [], []>} : vector<16x32xf32>, vector<32x256xf32>, vector<16x256xf32> -> vector<16x256xf32>
    %167 = vector.extract_strided_slice %166 {offsets = [0, 0], sizes = [8, 128], strides = [1, 1]} : vector<16x256xf32> to vector<8x128xf32>
    %168 = vector.extract_strided_slice %166 {offsets = [8, 128], sizes = [8, 128], strides = [1, 1]} : vector<16x256xf32> to vector<8x128xf32>
    %169 = vector.extract_strided_slice %5 {offsets = [32, 0], sizes = [8, 128], strides = [1, 1]} : vector<64x128xf32> to vector<8x128xf32>
    %170 = arith.addf %169, %167 : vector<8x128xf32>
    %171 = arith.mulf %16, %170 : vector<8x128xf32>
    %172 = math.tanh %171 : vector<8x128xf32>
    %173 = arith.mulf %16, %172 : vector<8x128xf32>
    %174 = arith.addf %173, %19 : vector<8x128xf32>
    %175 = vector.extract_strided_slice %174 {offsets = [0, 0], sizes = [8, 32], strides = [1, 1]} : vector<8x128xf32> to vector<8x32xf32>
    %176 = vector.extract_strided_slice %174 {offsets = [0, 32], sizes = [8, 32], strides = [1, 1]} : vector<8x128xf32> to vector<8x32xf32>
    %177 = vector.extract_strided_slice %174 {offsets = [0, 64], sizes = [8, 32], strides = [1, 1]} : vector<8x128xf32> to vector<8x32xf32>
    %178 = vector.extract_strided_slice %174 {offsets = [0, 96], sizes = [8, 32], strides = [1, 1]} : vector<8x128xf32> to vector<8x32xf32>
    %179 = arith.mulf %176, %146 : vector<8x32xf32>
    %180 = arith.mulf %175, %177 : vector<8x32xf32>
    %181 = arith.addf %179, %180 : vector<8x32xf32>
    %182 = math.tanh %181 : vector<8x32xf32>
    %183 = arith.mulf %178, %182 : vector<8x32xf32>
    %cst_25 = arith.constant dense<0.000000e+00> : vector<8x128xf32>
    %184 = tpu.matmul %183, %7, %cst_25 {dimension_numbers = #tpu.dot_dimension_numbers<[1], [0], [0], [1], [0, 0, 1, 1], [], []>} : vector<8x32xf32>, vector<32x128xf32>, vector<8x128xf32> -> vector<8x128xf32>
    %185 = arith.addf %184, %168 : vector<8x128xf32>
    %186 = arith.mulf %16, %185 : vector<8x128xf32>
    %187 = arith.addf %186, %23 : vector<8x128xf32>
    %188 = math.tanh %187 : vector<8x128xf32>
    %189 = arith.mulf %16, %188 : vector<8x128xf32>
    %190 = arith.addf %189, %19 : vector<8x128xf32>
    %191 = vector.extract_strided_slice %190 {offsets = [0, 0], sizes = [8, 32], strides = [1, 1]} : vector<8x128xf32> to vector<8x32xf32>
    %192 = vector.extract_strided_slice %190 {offsets = [0, 32], sizes = [8, 32], strides = [1, 1]} : vector<8x128xf32> to vector<8x32xf32>
    %193 = vector.extract_strided_slice %190 {offsets = [0, 64], sizes = [8, 32], strides = [1, 1]} : vector<8x128xf32> to vector<8x32xf32>
    %194 = vector.extract_strided_slice %190 {offsets = [0, 96], sizes = [8, 32], strides = [1, 1]} : vector<8x128xf32> to vector<8x32xf32>
    %195 = arith.mulf %192, %162 : vector<8x32xf32>
    %196 = arith.mulf %191, %193 : vector<8x32xf32>
    %197 = arith.addf %195, %196 : vector<8x32xf32>
    %198 = math.tanh %197 : vector<8x32xf32>
    %199 = arith.mulf %194, %198 : vector<8x32xf32>
    %200 = tpu.concatenate %183, %199 in 0 : vector<8x32xf32>, vector<8x32xf32> -> vector<16x32xf32>
    %cst_26 = arith.constant dense<0.000000e+00> : vector<16x256xf32>
    %201 = tpu.matmul %200, %6, %cst_26 {dimension_numbers = #tpu.dot_dimension_numbers<[1], [0], [0], [1], [0, 0, 1, 1], [], []>} : vector<16x32xf32>, vector<32x256xf32>, vector<16x256xf32> -> vector<16x256xf32>
    %202 = vector.extract_strided_slice %201 {offsets = [0, 0], sizes = [8, 128], strides = [1, 1]} : vector<16x256xf32> to vector<8x128xf32>
    %203 = vector.extract_strided_slice %201 {offsets = [8, 128], sizes = [8, 128], strides = [1, 1]} : vector<16x256xf32> to vector<8x128xf32>
    %204 = vector.extract_strided_slice %5 {offsets = [40, 0], sizes = [8, 128], strides = [1, 1]} : vector<64x128xf32> to vector<8x128xf32>
    %205 = arith.addf %204, %202 : vector<8x128xf32>
    %206 = arith.mulf %16, %205 : vector<8x128xf32>
    %207 = math.tanh %206 : vector<8x128xf32>
    %208 = arith.mulf %16, %207 : vector<8x128xf32>
    %209 = arith.addf %208, %19 : vector<8x128xf32>
    %210 = vector.extract_strided_slice %209 {offsets = [0, 0], sizes = [8, 32], strides = [1, 1]} : vector<8x128xf32> to vector<8x32xf32>
    %211 = vector.extract_strided_slice %209 {offsets = [0, 32], sizes = [8, 32], strides = [1, 1]} : vector<8x128xf32> to vector<8x32xf32>
    %212 = vector.extract_strided_slice %209 {offsets = [0, 64], sizes = [8, 32], strides = [1, 1]} : vector<8x128xf32> to vector<8x32xf32>
    %213 = vector.extract_strided_slice %209 {offsets = [0, 96], sizes = [8, 32], strides = [1, 1]} : vector<8x128xf32> to vector<8x32xf32>
    %214 = arith.mulf %211, %181 : vector<8x32xf32>
    %215 = arith.mulf %210, %212 : vector<8x32xf32>
    %216 = arith.addf %214, %215 : vector<8x32xf32>
    %217 = math.tanh %216 : vector<8x32xf32>
    %218 = arith.mulf %213, %217 : vector<8x32xf32>
    %cst_27 = arith.constant dense<0.000000e+00> : vector<8x128xf32>
    %219 = tpu.matmul %218, %7, %cst_27 {dimension_numbers = #tpu.dot_dimension_numbers<[1], [0], [0], [1], [0, 0, 1, 1], [], []>} : vector<8x32xf32>, vector<32x128xf32>, vector<8x128xf32> -> vector<8x128xf32>
    %220 = arith.addf %219, %203 : vector<8x128xf32>
    %221 = arith.mulf %16, %220 : vector<8x128xf32>
    %222 = arith.addf %221, %23 : vector<8x128xf32>
    %223 = math.tanh %222 : vector<8x128xf32>
    %224 = arith.mulf %16, %223 : vector<8x128xf32>
    %225 = arith.addf %224, %19 : vector<8x128xf32>
    %226 = vector.extract_strided_slice %225 {offsets = [0, 0], sizes = [8, 32], strides = [1, 1]} : vector<8x128xf32> to vector<8x32xf32>
    %227 = vector.extract_strided_slice %225 {offsets = [0, 32], sizes = [8, 32], strides = [1, 1]} : vector<8x128xf32> to vector<8x32xf32>
    %228 = vector.extract_strided_slice %225 {offsets = [0, 64], sizes = [8, 32], strides = [1, 1]} : vector<8x128xf32> to vector<8x32xf32>
    %229 = vector.extract_strided_slice %225 {offsets = [0, 96], sizes = [8, 32], strides = [1, 1]} : vector<8x128xf32> to vector<8x32xf32>
    %230 = arith.mulf %227, %197 : vector<8x32xf32>
    %231 = arith.mulf %226, %228 : vector<8x32xf32>
    %232 = arith.addf %230, %231 : vector<8x32xf32>
    %233 = math.tanh %232 : vector<8x32xf32>
    %234 = arith.mulf %229, %233 : vector<8x32xf32>
    %235 = tpu.concatenate %218, %234 in 0 : vector<8x32xf32>, vector<8x32xf32> -> vector<16x32xf32>
    %cst_28 = arith.constant dense<0.000000e+00> : vector<16x256xf32>
    %236 = tpu.matmul %235, %6, %cst_28 {dimension_numbers = #tpu.dot_dimension_numbers<[1], [0], [0], [1], [0, 0, 1, 1], [], []>} : vector<16x32xf32>, vector<32x256xf32>, vector<16x256xf32> -> vector<16x256xf32>
    %237 = vector.extract_strided_slice %236 {offsets = [0, 0], sizes = [8, 128], strides = [1, 1]} : vector<16x256xf32> to vector<8x128xf32>
    %238 = vector.extract_strided_slice %236 {offsets = [8, 128], sizes = [8, 128], strides = [1, 1]} : vector<16x256xf32> to vector<8x128xf32>
    %239 = vector.extract_strided_slice %5 {offsets = [48, 0], sizes = [8, 128], strides = [1, 1]} : vector<64x128xf32> to vector<8x128xf32>
    %240 = arith.addf %239, %237 : vector<8x128xf32>
    %241 = arith.mulf %16, %240 : vector<8x128xf32>
    %242 = math.tanh %241 : vector<8x128xf32>
    %243 = arith.mulf %16, %242 : vector<8x128xf32>
    %244 = arith.addf %243, %19 : vector<8x128xf32>
    %245 = vector.extract_strided_slice %244 {offsets = [0, 0], sizes = [8, 32], strides = [1, 1]} : vector<8x128xf32> to vector<8x32xf32>
    %246 = vector.extract_strided_slice %244 {offsets = [0, 32], sizes = [8, 32], strides = [1, 1]} : vector<8x128xf32> to vector<8x32xf32>
    %247 = vector.extract_strided_slice %244 {offsets = [0, 64], sizes = [8, 32], strides = [1, 1]} : vector<8x128xf32> to vector<8x32xf32>
    %248 = vector.extract_strided_slice %244 {offsets = [0, 96], sizes = [8, 32], strides = [1, 1]} : vector<8x128xf32> to vector<8x32xf32>
    %249 = arith.mulf %246, %216 : vector<8x32xf32>
    %250 = arith.mulf %245, %247 : vector<8x32xf32>
    %251 = arith.addf %249, %250 : vector<8x32xf32>
    %252 = math.tanh %251 : vector<8x32xf32>
    %253 = arith.mulf %248, %252 : vector<8x32xf32>
    %cst_29 = arith.constant dense<0.000000e+00> : vector<8x128xf32>
    %254 = tpu.matmul %253, %7, %cst_29 {dimension_numbers = #tpu.dot_dimension_numbers<[1], [0], [0], [1], [0, 0, 1, 1], [], []>} : vector<8x32xf32>, vector<32x128xf32>, vector<8x128xf32> -> vector<8x128xf32>
    %255 = arith.addf %254, %238 : vector<8x128xf32>
    %256 = arith.mulf %16, %255 : vector<8x128xf32>
    %257 = arith.addf %256, %23 : vector<8x128xf32>
    %258 = math.tanh %257 : vector<8x128xf32>
    %259 = arith.mulf %16, %258 : vector<8x128xf32>
    %260 = arith.addf %259, %19 : vector<8x128xf32>
    %261 = vector.extract_strided_slice %260 {offsets = [0, 0], sizes = [8, 32], strides = [1, 1]} : vector<8x128xf32> to vector<8x32xf32>
    %262 = vector.extract_strided_slice %260 {offsets = [0, 32], sizes = [8, 32], strides = [1, 1]} : vector<8x128xf32> to vector<8x32xf32>
    %263 = vector.extract_strided_slice %260 {offsets = [0, 64], sizes = [8, 32], strides = [1, 1]} : vector<8x128xf32> to vector<8x32xf32>
    %264 = vector.extract_strided_slice %260 {offsets = [0, 96], sizes = [8, 32], strides = [1, 1]} : vector<8x128xf32> to vector<8x32xf32>
    %265 = arith.mulf %262, %232 : vector<8x32xf32>
    %266 = arith.mulf %261, %263 : vector<8x32xf32>
    %267 = arith.addf %265, %266 : vector<8x32xf32>
    %268 = math.tanh %267 : vector<8x32xf32>
    %269 = arith.mulf %264, %268 : vector<8x32xf32>
    %270 = tpu.concatenate %253, %269 in 0 : vector<8x32xf32>, vector<8x32xf32> -> vector<16x32xf32>
    %cst_30 = arith.constant dense<0.000000e+00> : vector<16x256xf32>
    %271 = tpu.matmul %270, %6, %cst_30 {dimension_numbers = #tpu.dot_dimension_numbers<[1], [0], [0], [1], [0, 0, 1, 1], [], []>} : vector<16x32xf32>, vector<32x256xf32>, vector<16x256xf32> -> vector<16x256xf32>
    %272 = vector.extract_strided_slice %271 {offsets = [0, 0], sizes = [8, 128], strides = [1, 1]} : vector<16x256xf32> to vector<8x128xf32>
    %273 = vector.extract_strided_slice %271 {offsets = [8, 128], sizes = [8, 128], strides = [1, 1]} : vector<16x256xf32> to vector<8x128xf32>
    %274 = vector.extract_strided_slice %5 {offsets = [56, 0], sizes = [8, 128], strides = [1, 1]} : vector<64x128xf32> to vector<8x128xf32>
    %275 = arith.addf %274, %272 : vector<8x128xf32>
    %276 = arith.mulf %16, %275 : vector<8x128xf32>
    %277 = math.tanh %276 : vector<8x128xf32>
    %278 = arith.mulf %16, %277 : vector<8x128xf32>
    %279 = arith.addf %278, %19 : vector<8x128xf32>
    %280 = vector.extract_strided_slice %279 {offsets = [0, 0], sizes = [8, 32], strides = [1, 1]} : vector<8x128xf32> to vector<8x32xf32>
    %281 = vector.extract_strided_slice %279 {offsets = [0, 32], sizes = [8, 32], strides = [1, 1]} : vector<8x128xf32> to vector<8x32xf32>
    %282 = vector.extract_strided_slice %279 {offsets = [0, 64], sizes = [8, 32], strides = [1, 1]} : vector<8x128xf32> to vector<8x32xf32>
    %283 = vector.extract_strided_slice %279 {offsets = [0, 96], sizes = [8, 32], strides = [1, 1]} : vector<8x128xf32> to vector<8x32xf32>
    %284 = arith.mulf %281, %251 : vector<8x32xf32>
    %285 = arith.mulf %280, %282 : vector<8x32xf32>
    %286 = arith.addf %284, %285 : vector<8x32xf32>
    %287 = math.tanh %286 : vector<8x32xf32>
    %288 = arith.mulf %283, %287 : vector<8x32xf32>
    %cst_31 = arith.constant dense<0.000000e+00> : vector<8x128xf32>
    %289 = tpu.matmul %288, %7, %cst_31 {dimension_numbers = #tpu.dot_dimension_numbers<[1], [0], [0], [1], [0, 0, 1, 1], [], []>} : vector<8x32xf32>, vector<32x128xf32>, vector<8x128xf32> -> vector<8x128xf32>
    %290 = arith.addf %289, %273 : vector<8x128xf32>
    %291 = arith.mulf %16, %290 : vector<8x128xf32>
    %292 = arith.addf %291, %23 : vector<8x128xf32>
    %293 = math.tanh %292 : vector<8x128xf32>
    %294 = arith.mulf %16, %293 : vector<8x128xf32>
    %295 = arith.addf %294, %19 : vector<8x128xf32>
    %296 = vector.extract_strided_slice %295 {offsets = [0, 0], sizes = [8, 32], strides = [1, 1]} : vector<8x128xf32> to vector<8x32xf32>
    %297 = vector.extract_strided_slice %295 {offsets = [0, 32], sizes = [8, 32], strides = [1, 1]} : vector<8x128xf32> to vector<8x32xf32>
    %298 = vector.extract_strided_slice %295 {offsets = [0, 64], sizes = [8, 32], strides = [1, 1]} : vector<8x128xf32> to vector<8x32xf32>
    %299 = vector.extract_strided_slice %295 {offsets = [0, 96], sizes = [8, 32], strides = [1, 1]} : vector<8x128xf32> to vector<8x32xf32>
    %300 = arith.mulf %297, %267 : vector<8x32xf32>
    %301 = arith.mulf %296, %298 : vector<8x32xf32>
    %302 = arith.addf %300, %301 : vector<8x32xf32>
    %303 = math.tanh %302 : vector<8x32xf32>
    %304 = arith.mulf %299, %303 : vector<8x32xf32>
    %c0_32 = arith.constant 0 : index
    %c0_33 = arith.constant 0 : index
    %305 = vector.load %arg6[%c0_32, %c0_33] : memref<32x128xf32, #tpu.memory_space<vmem>>, vector<32x128xf32>
    %cst_34 = arith.constant dense<0.000000e+00> : vector<8x128xf32>
    %306 = tpu.matmul %304, %305, %cst_34 {dimension_numbers = #tpu.dot_dimension_numbers<[1], [0], [0], [1], [0, 0, 1, 1], [], []>} : vector<8x32xf32>, vector<32x128xf32>, vector<8x128xf32> -> vector<8x128xf32>
    %c0_35 = arith.constant 0 : index
    %c0_36 = arith.constant 0 : index
    %307 = vector.load %arg7[%c0_35, %c0_36] : memref<1x1xf32, #tpu.memory_space<vmem>>, vector<1x1xf32>
    %308 = vector.broadcast %307 : vector<1x1xf32> to vector<8x128xf32>
    %309 = arith.addf %306, %308 : vector<8x128xf32>
    %c0_37 = arith.constant 0 : index
    %c0_38 = arith.constant 0 : index
    %310 = vector.load %arg8[%c0_37, %c0_38] : memref<8x128xf32, #tpu.memory_space<vmem>>, vector<8x128xf32>
    tpu.vector_store %arg8[%c0_37, %c0_38], %309 {strides = array<i32>} : memref<8x128xf32, #tpu.memory_space<vmem>>, vector<8x128xf32>,
    return
  }
}

</mosaic_0001>

<llo_original>
// kernel: tpu_custom_call.1
$region0: #{tpu_custom_call.1}
  #allocation0 [shape = 'u32[]', space=smem, size = 0x4, offset = 0x4, fixed_abs, tag = 'smem constant byte address 0x4 - core index']
  #allocation1 [shape = 'u32[72,128]{1,0:T(1,128)}', space=vmem, size = 0x9000, scoped, tag = 'internal scratch']
  #allocation2 [shape = 'f32[1,1]{1,0:T(1,128)S(1)}', space=vmem, size = 0x200, scoped, tag = 'scoped memory for tpu_custom_call.1']
  %s0 = inlined_call_operand.vmem [shape: f32[64,16], index: 0, kind: input, shape index: {}]
  %s1 = inlined_call_operand.vmem [shape: f32[16,128], index: 1, kind: input, shape index: {}]
  %s2 = inlined_call_operand.vmem [shape: f32[32,256], index: 2, kind: input, shape index: {}]
  %s3 = inlined_call_operand.vmem [shape: f32[1,128], index: 3, kind: input, shape index: {}]
  %s4 = inlined_call_operand.hbm [shape: f32[32,128], index: 4, kind: input, shape index: {}]
  %s5 = inlined_call_operand.vmem [shape: f32[1,128], index: 5, kind: input, shape index: {}]
  %s6 = inlined_call_operand.hbm [shape: f32[32,128], index: 6, kind: input, shape index: {}]
  %s7 = inlined_call_operand.<no memory space> [shape: f32[1,1], index: 7, kind: input, shape index: {}]
  %s8 = inlined_call_operand.hbm [shape: f32[8,128], index: 8, kind: output, shape index: {}]
  %s9 = sld [smem:[#allocation0]]
  $region50: #{tpu_custom_call.1} parent=0
    _
  %s11 = ssub.s32 1, %s9
  %s12 = scalar_select 0, %s11, %s9
  %v13 = vstv %s7
  %14 = vst [vmem:[#allocation2] sm:$0x1] %v13
  $region1: #{tpu_custom_call.1} parent=0
    #allocation3 [shape = 'u8[16384]{0}', space=vmem, size = 0x4000, scoped, tag = 'input window, operand 4, single buffered']
    #allocation4 [shape = 's32[1]{0}', space=sflag, size = 0x4, scoped, tag = 'scoped memory for tpu_custom_call.1']
    #allocation5 [shape = 's32[1]{0}', space=sflag, size = 0x4, scoped, tag = 'scoped memory for tpu_custom_call.1']
    #allocation6 [shape = 'u8[16384]{0}', space=vmem, size = 0x4000, scoped, tag = 'input window, operand 6, single buffered']
    #allocation7 [shape = 's32[1]{0}', space=sflag, size = 0x4, scoped, tag = 'scoped memory for tpu_custom_call.1']
    #allocation8 [shape = 'u8[4096]{0}', space=vmem, size = 0x1000, scoped, tag = 'output window, operand 0, single buffered']
    %15 = vsyncpa [#allocation4], 0
    %16 = vsyncpa [#allocation7], 0
    %17 = vsyncpa [#allocation5], 0
    // Predicated region
    $region2: #{tpu_custom_call.1} parent=1 // pred_check
      _
    $region3: #{tpu_custom_call.1} parent=1 // pred_check_branch
      %19 = sbr.rel (0) target = $region5
    $region4: #{tpu_custom_call.1} parent=1 // pred_region
      _
    $region5: #{tpu_custom_call.1} parent=1 // pred_fallthru
      _
    // Predicated region
    $region6: #{tpu_custom_call.1} parent=1 // pred_check
      _
    $region7: #{tpu_custom_call.1} parent=1 // pred_check_branch
      %21 = sbr.rel (0) target = $region9
    $region8: #{tpu_custom_call.1} parent=1 // pred_region
      _
    $region9: #{tpu_custom_call.1} parent=1 // pred_fallthru
      _
    // Predicated region
    $region10: #{tpu_custom_call.1} parent=1 // pred_check
      _
    $region11: #{tpu_custom_call.1} parent=1 // pred_check_branch
      %23 = sbr.rel (0) target = $region13
    $region12: #{tpu_custom_call.1} parent=1 // pred_region
      _
    $region13: #{tpu_custom_call.1} parent=1 // pred_fallthru
      _
    // Predicated region
    $region14: #{tpu_custom_call.1} parent=1 // pred_check
      _
    $region15: #{tpu_custom_call.1} parent=1 // pred_check_branch
      %25 = sbr.rel (0) target = $region17
    $region16: #{tpu_custom_call.1} parent=1 // pred_region
      _
    $region17: #{tpu_custom_call.1} parent=1 // pred_fallthru
      _
    // Predicated region
    $region18: #{tpu_custom_call.1} parent=1 // pred_check
      _
    $region19: #{tpu_custom_call.1} parent=1 // pred_check_branch
      %27 = sbr.rel (0) target = $region21
    $region20: #{tpu_custom_call.1} parent=1 // pred_region
      %29 = vsyncadd [#allocation4], 0
      %s30 = sshll.u32 %s4, 4
      %s31 = int_to_ptr.hbm [resolvable:$true] %s30
      %s32 = sshll.u32 [#allocation3], 4
      %s33 = int_to_ptr.vmem [resolvable:$true] %s32
      %38 = dma.hbm_to_vmem [thread:$0]  %s31, 512, %s33, [#allocation4], 128, 128, 8
    $region21: #{tpu_custom_call.1} parent=1 // pred_fallthru
      _
    // Predicated region
    $region22: #{tpu_custom_call.1} parent=1 // pred_check
      _
    $region23: #{tpu_custom_call.1} parent=1 // pred_check_branch
      %40 = sbr.rel (0) target = $region25
    $region24: #{tpu_custom_call.1} parent=1 // pred_region
      _
    $region25: #{tpu_custom_call.1} parent=1 // pred_fallthru
      _
    // Predicated region
    $region26: #{tpu_custom_call.1} parent=1 // pred_check
      _
    $region27: #{tpu_custom_call.1} parent=1 // pred_check_branch
      %42 = sbr.rel (0) target = $region29
    $region28: #{tpu_custom_call.1} parent=1 // pred_region
      %44 = vsyncadd [#allocation7], 0
      %s45 = sshll.u32 %s6, 4
      %s46 = int_to_ptr.hbm [resolvable:$true] %s45
      %s47 = sshll.u32 [#allocation6], 4
      %s48 = int_to_ptr.vmem [resolvable:$true] %s47
      %53 = dma.hbm_to_vmem [thread:$0]  %s46, 512, %s48, [#allocation7], 128, 128, 8
    $region29: #{tpu_custom_call.1} parent=1 // pred_fallthru
      _
    // Predicated region
    $region30: #{tpu_custom_call.1} parent=1 // pred_check
      _
    $region31: #{tpu_custom_call.1} parent=1 // pred_check_branch
      %55 = sbr.rel (0) target = $region33
    $region32: #{tpu_custom_call.1} parent=1 // pred_region
      _
    $region33: #{tpu_custom_call.1} parent=1 // pred_fallthru
      _
    // Predicated region
    $region34: #{tpu_custom_call.1} parent=1 // pred_check
      _
    $region35: #{tpu_custom_call.1} parent=1 // pred_check_branch
      %57 = sbr.rel (0) target = $region37
    $region36: #{tpu_custom_call.1} parent=1 // pred_region
      %59 = dma.done [#allocation4], 512
    $region37: #{tpu_custom_call.1} parent=1 // pred_fallthru
      _
    // Predicated region
    $region38: #{tpu_custom_call.1} parent=1 // pred_check
      _
    $region39: #{tpu_custom_call.1} parent=1 // pred_check_branch
      %61 = sbr.rel (0) target = $region41
    $region40: #{tpu_custom_call.1} parent=1 // pred_region
      %63 = dma.done [#allocation7], 512
    $region41: #{tpu_custom_call.1} parent=1 // pred_fallthru
      _
    %v64 = vld [vmem:[%s0] sm:$0xff]
    %v65 = vld [vmem:[%s0 + $0x8] sm:$0xff]
    %v66 = vld [vmem:[%s0 + $0x10] sm:$0xff]
    %v67 = vld [vmem:[%s0 + $0x18] sm:$0xff]
    %v68 = vld [vmem:[%s0 + $0x20] sm:$0xff]
    %v69 = vld [vmem:[%s0 + $0x28] sm:$0xff]
    %v70 = vld [vmem:[%s0 + $0x30] sm:$0xff]
    %v71 = vld [vmem:[%s0 + $0x38] sm:$0xff]
    %v72 = vld [vmem:[%s1] sm:$0xff]
    %v73 = vld [vmem:[%s1 + $0x8] sm:$0xff]
    %v74 = vld [vmem:[%s3] sm:$0x1]
    %v76 = vperm.slane %v74, 0
    %vm78 = vcmask 130048
    %v80 = vsel %vm78, %v64, 0
    %v83 = vsel %vm78, %v65, 0
    %v86 = vsel %vm78, %v66, 0
    %v89 = vsel %vm78, %v67, 0
    %v92 = vsel %vm78, %v68, 0
    %v95 = vsel %vm78, %v69, 0
    %v98 = vsel %vm78, %v70, 0
    %v101 = vsel %vm78, %v71, 0
    %103 = vmatpush.msra.mxu0 0.0
    %104 = vmatpush.msra.mxu0 0.0
    %105 = vmatpush.msra.mxu0 0.0
    %106 = vmatpush.msra.mxu0 0.0
    %107 = vmatpush.msra.mxu0 0.0
    %108 = vmatpush.msra.mxu0 0.0
    %109 = vmatpush.msra.mxu0 0.0
    %110 = vmatpush.msra.mxu0 0.0
    %111 = vmatpush.msra.mxu0 0.0
    %112 = vmatpush.msra.mxu0 0.0
    %113 = vmatpush.msra.mxu0 0.0
    %114 = vmatpush.msra.mxu0 0.0
    %115 = vmatpush.msra.mxu0 0.0
    %116 = vmatpush.msra.mxu0 0.0
    %117 = vmatpush.msra.mxu0 %v73
    %118 = vmatpush.msra.mxu0 %v72
    %119 = vmatmul.f32.gmra.mxu0 %v80
    %v120 = vpop.f32.mrf.mxu0
    %v121 = vadd.f32 %v76, %v120
    %122 = vmatmul.f32.gmra.mxu0 %v83
    %v123 = vpop.f32.mrf.mxu0
    %v124 = vadd.f32 %v76, %v123
    %125 = vmatmul.f32.gmra.mxu0 %v86
    %v126 = vpop.f32.mrf.mxu0
    %v127 = vadd.f32 %v76, %v126
    %128 = vmatmul.f32.gmra.mxu0 %v89
    %v129 = vpop.f32.mrf.mxu0
    %v130 = vadd.f32 %v76, %v129
    %131 = vmatmul.f32.gmra.mxu0 %v92
    %v132 = vpop.f32.mrf.mxu0
    %v133 = vadd.f32 %v76, %v132
    %134 = vmatmul.f32.gmra.mxu0 %v95
    %v135 = vpop.f32.mrf.mxu0
    %v136 = vadd.f32 %v76, %v135
    %137 = vmatmul.f32.gmra.mxu0 %v98
    %v138 = vpop.f32.mrf.mxu0
    %v139 = vadd.f32 %v76, %v138
    %140 = vmatmul.f32.gmra.mxu0 %v101
    %v141 = vpop.f32.mrf.mxu0
    %v142 = vadd.f32 %v76, %v141
    %143 = vdwg.mxu0
    %v144 = vld [vmem:[%s2] sm:$0xff]
    %v145 = vld [vmem:[%s2 + $0x8] sm:$0xff]
    %v146 = vld [vmem:[%s2 + $0x10] sm:$0xff]
    %v147 = vld [vmem:[%s2 + $0x18] sm:$0xff]
    %v148 = vld [vmem:[%s2 + $0x20] sm:$0xff]
    %v149 = vld [vmem:[%s2 + $0x28] sm:$0xff]
    %v150 = vld [vmem:[%s2 + $0x30] sm:$0xff]
    %v151 = vld [vmem:[%s2 + $0x38] sm:$0xff]
    %v152 = vld [vmem:[#allocation3] sm:$0xff]
    %v153 = vld [vmem:[#allocation3 + $0x8] sm:$0xff]
    %v154 = vld [vmem:[#allocation3 + $0x10] sm:$0xff]
    %v155 = vld [vmem:[#allocation3 + $0x18] sm:$0xff]
    %v156 = vlaneseq
    %v157 = vand.u32 %v156, 127
    %vm158 = vcmp.ge.s32.totalorder %v157, 64
    %vm159 = vcmp.lt.s32.totalorder %v157, 96
    %vm160 = vmand %vm158, %vm159
    %v161 = vsel %vm160, 1.0, 0.5
    %v162 = vsel %vm160, 0.0, 0.5
    %v163 = vld [vmem:[%s5] sm:$0x1]
    %v165 = vperm.slane %v163, 0
    %v167 = vmul.f32 %v161, %v165
    %vm168 = vcmask 261120
    %v170 = vsel %vm168, 0.0, 0
    %172 = vmatpush.msra.mxu0 0.0
    %173 = vmatpush.msra.mxu0 0.0
    %174 = vmatpush.msra.mxu0 0.0
    %175 = vmatpush.msra.mxu0 0.0
    %176 = vmatpush.msra.mxu0 0.0
    %177 = vmatpush.msra.mxu0 0.0
    %178 = vmatpush.msra.mxu0 0.0
    %179 = vmatpush.msra.mxu0 0.0
    %180 = vmatpush.msra.mxu0 0.0
    %181 = vmatpush.msra.mxu0 0.0
    %182 = vmatpush.msra.mxu0 0.0
    %183 = vmatpush.msra.mxu0 0.0
    %184 = vmatpush.msra.mxu0 %v150
    %185 = vmatpush.msra.mxu0 %v148
    %186 = vmatpush.msra.mxu0 %v146
    %187 = vmatpush.msra.mxu0 %v144
    %188 = vmatmul.f32.gmra.mxu0 %v170
    %v189 = vpop.f32.mrf.mxu0
    %v190 = vadd.f32 0.0, %v189
    %191 = vmatmul.f32.gmra.mxu0 %v170
    %v192 = vpop.f32.mrf.mxu0
    %193 = vdwg.mxu0
    %194 = vmatpush.msra.mxu0 0.0
    %195 = vmatpush.msra.mxu0 0.0
    %196 = vmatpush.msra.mxu0 0.0
    %197 = vmatpush.msra.mxu0 0.0
    %198 = vmatpush.msra.mxu0 0.0
    %199 = vmatpush.msra.mxu0 0.0
    %200 = vmatpush.msra.mxu0 0.0
    %201 = vmatpush.msra.mxu0 0.0
    %202 = vmatpush.msra.mxu0 0.0
    %203 = vmatpush.msra.mxu0 0.0
    %204 = vmatpush.msra.mxu0 0.0
    %205 = vmatpush.msra.mxu0 0.0
    %206 = vmatpush.msra.mxu0 %v151
    %207 = vmatpush.msra.mxu0 %v149
    %208 = vmatpush.msra.mxu0 %v147
    %209 = vmatpush.msra.mxu0 %v145
    %210 = vmatmul.f32.gmra.mxu0 %v170
    %v211 = vpop.f32.mrf.mxu0
    %212 = vmatmul.f32.gmra.mxu0 %v170
    %v213 = vpop.f32.mrf.mxu0
    %v214 = vadd.f32 0.0, %v213
    %215 = vdwg.mxu0
    %v216 = vadd.f32 %v121, %v190
    %v217 = vmul.f32 %v161, %v216
    %v218 = vtanh.pop %v217
    %v219 = vmul.f32 %v161, %v218
    %v220 = vadd.f32 %v219, %v162
    %v221 = vmul.f32 %v220, 0.0
    %223 = vrot.lane.b32.xlu0 %v220, 64
    %v224 = vpop.permute.xlu0 %223
    %v226 = vmul.f32 %v220, %v224
    %228 = vrot.lane.b32.xlu0 %v226, 32
    %v229 = vpop.permute.xlu0 %228
    %v231 = vadd.f32 %v221, %v229
    %v232 = vtanh.pop %v231
    %234 = vrot.lane.b32.xlu0 %v232, 64
    %v235 = vpop.permute.xlu0 %234
    %v237 = vmul.f32 %v220, %v235
    %239 = vrot.lane.b32.xlu0 %v237, 32
    %v240 = vpop.permute.xlu0 %239
    %v241 = vsel %vm168, %v240, 0
    %243 = vmatpush.msra.mxu0 0.0
    %244 = vmatpush.msra.mxu0 0.0
    %245 = vmatpush.msra.mxu0 0.0
    %246 = vmatpush.msra.mxu0 0.0
    %247 = vmatpush.msra.mxu0 0.0
    %248 = vmatpush.msra.mxu0 0.0
    %249 = vmatpush.msra.mxu0 0.0
    %250 = vmatpush.msra.mxu0 0.0
    %251 = vmatpush.msra.mxu0 0.0
    %252 = vmatpush.msra.mxu0 0.0
    %253 = vmatpush.msra.mxu0 0.0
    %254 = vmatpush.msra.mxu0 0.0
    %255 = vmatpush.msra.mxu0 %v155
    %256 = vmatpush.msra.mxu0 %v154
    %257 = vmatpush.msra.mxu0 %v153
    %258 = vmatpush.msra.mxu0 %v152
    %259 = vmatmul.f32.gmra.mxu0 %v241
    %v260 = vpop.f32.mrf.mxu0
    %v261 = vadd.f32 %v214, %v260
    %262 = vdwg.mxu0
    %v263 = vmul.f32 %v161, %v261
    %v264 = vadd.f32 %v263, %v167
    %v265 = vtanh.pop %v264
    %v266 = vmul.f32 %v161, %v265
    %v267 = vadd.f32 %v266, %v162
    %v268 = vmul.f32 %v267, 0.0
    %270 = vrot.lane.b32.xlu0 %v267, 64
    %v271 = vpop.permute.xlu0 %270
    %v273 = vmul.f32 %v267, %v271
    %275 = vrot.lane.b32.xlu0 %v273, 32
    %v276 = vpop.permute.xlu0 %275
    %v278 = vadd.f32 %v268, %v276
    %v279 = vtanh.pop %v278
    %281 = vrot.lane.b32.xlu0 %v279, 64
    %v282 = vpop.permute.xlu0 %281
    %v284 = vmul.f32 %v267, %v282
    %286 = vrot.lane.b32.xlu0 %v284, 32
    %v287 = vpop.permute.xlu0 %286
    %v288 = vsel %vm168, %v287, 0
    %290 = vmatpush.msra.mxu0 0.0
    %291 = vmatpush.msra.mxu0 0.0
    %292 = vmatpush.msra.mxu0 0.0
    %293 = vmatpush.msra.mxu0 0.0
    %294 = vmatpush.msra.mxu0 0.0
    %295 = vmatpush.msra.mxu0 0.0
    %296 = vmatpush.msra.mxu0 0.0
    %297 = vmatpush.msra.mxu0 0.0
    %298 = vmatpush.msra.mxu0 0.0
    %299 = vmatpush.msra.mxu0 0.0
    %300 = vmatpush.msra.mxu0 0.0
    %301 = vmatpush.msra.mxu0 0.0
    %302 = vmatpush.msra.mxu0 %v150
    %303 = vmatpush.msra.mxu0 %v148
    %304 = vmatpush.msra.mxu0 %v146
    %305 = vmatpush.msra.mxu0 %v144
    %306 = vmatmul.f32.gmra.mxu0 %v241
    %v307 = vpop.f32.mrf.mxu0
    %v308 = vadd.f32 0.0, %v307
    %309 = vmatmul.f32.gmra.mxu0 %v288
    %v310 = vpop.f32.mrf.mxu0
    %311 = vdwg.mxu0
    %312 = vmatpush.msra.mxu0 0.0
    %313 = vmatpush.msra.mxu0 0.0
    %314 = vmatpush.msra.mxu0 0.0
    %315 = vmatpush.msra.mxu0 0.0
    %316 = vmatpush.msra.mxu0 0.0
    %317 = vmatpush.msra.mxu0 0.0
    %318 = vmatpush.msra.mxu0 0.0
    %319 = vmatpush.msra.mxu0 0.0
    %320 = vmatpush.msra.mxu0 0.0
    %321 = vmatpush.msra.mxu0 0.0
    %322 = vmatpush.msra.mxu0 0.0
    %323 = vmatpush.msra.mxu0 0.0
    %324 = vmatpush.msra.mxu0 %v151
    %325 = vmatpush.msra.mxu0 %v149
    %326 = vmatpush.msra.mxu0 %v147
    %327 = vmatpush.msra.mxu0 %v145
    %328 = vmatmul.f32.gmra.mxu0 %v241
    %v329 = vpop.f32.mrf.mxu0
    %330 = vmatmul.f32.gmra.mxu0 %v288
    %v331 = vpop.f32.mrf.mxu0
    %v332 = vadd.f32 0.0, %v331
    %333 = vdwg.mxu0
    %v334 = vadd.f32 %v124, %v308
    %v335 = vmul.f32 %v161, %v334
    %v336 = vtanh.pop %v335
    %v337 = vmul.f32 %v161, %v336
    %v338 = vadd.f32 %v337, %v162
    %v339 = vmul.f32 %v338, %v231
    %341 = vrot.lane.b32.xlu0 %v338, 64
    %v342 = vpop.permute.xlu0 %341
    %v344 = vmul.f32 %v338, %v342
    %346 = vrot.lane.b32.xlu0 %v344, 32
    %v347 = vpop.permute.xlu0 %346
    %v349 = vadd.f32 %v339, %v347
    %v350 = vtanh.pop %v349
    %352 = vrot.lane.b32.xlu0 %v350, 64
    %v353 = vpop.permute.xlu0 %352
    %v355 = vmul.f32 %v338, %v353
    %357 = vrot.lane.b32.xlu0 %v355, 32
    %v358 = vpop.permute.xlu0 %357
    %v359 = vsel %vm168, %v358, 0
    %361 = vmatpush.msra.mxu0 0.0
    %362 = vmatpush.msra.mxu0 0.0
    %363 = vmatpush.msra.mxu0 0.0
    %364 = vmatpush.msra.mxu0 0.0
    %365 = vmatpush.msra.mxu0 0.0
    %366 = vmatpush.msra.mxu0 0.0
    %367 = vmatpush.msra.mxu0 0.0
    %368 = vmatpush.msra.mxu0 0.0
    %369 = vmatpush.msra.mxu0 0.0
    %370 = vmatpush.msra.mxu0 0.0
    %371 = vmatpush.msra.mxu0 0.0
    %372 = vmatpush.msra.mxu0 0.0
    %373 = vmatpush.msra.mxu0 %v155
    %374 = vmatpush.msra.mxu0 %v154
    %375 = vmatpush.msra.mxu0 %v153
    %376 = vmatpush.msra.mxu0 %v152
    %377 = vmatmul.f32.gmra.mxu0 %v359
    %v378 = vpop.f32.mrf.mxu0
    %v379 = vadd.f32 %v332, %v378
    %380 = vdwg.mxu0
    %v381 = vmul.f32 %v161, %v379
    %v382 = vadd.f32 %v381, %v167
    %v383 = vtanh.pop %v382
    %v384 = vmul.f32 %v161, %v383
    %v385 = vadd.f32 %v384, %v162
    %v386 = vmul.f32 %v385, %v278
    %388 = vrot.lane.b32.xlu0 %v385, 64
    %v389 = vpop.permute.xlu0 %388
    %v391 = vmul.f32 %v385, %v389
    %393 = vrot.lane.b32.xlu0 %v391, 32
    %v394 = vpop.permute.xlu0 %393
    %v396 = vadd.f32 %v386, %v394
    %v397 = vtanh.pop %v396
    %399 = vrot.lane.b32.xlu0 %v397, 64
    %v400 = vpop.permute.xlu0 %399
    %v402 = vmul.f32 %v385, %v400
    %404 = vrot.lane.b32.xlu0 %v402, 32
    %v405 = vpop.permute.xlu0 %404
    %v406 = vsel %vm168, %v405, 0
    %408 = vmatpush.msra.mxu0 0.0
    %409 = vmatpush.msra.mxu0 0.0
    %410 = vmatpush.msra.mxu0 0.0
    %411 = vmatpush.msra.mxu0 0.0
    %412 = vmatpush.msra.mxu0 0.0
    %413 = vmatpush.msra.mxu0 0.0
    %414 = vmatpush.msra.mxu0 0.0
    %415 = vmatpush.msra.mxu0 0.0
    %416 = vmatpush.msra.mxu0 0.0
    %417 = vmatpush.msra.mxu0 0.0
    %418 = vmatpush.msra.mxu0 0.0
    %419 = vmatpush.msra.mxu0 0.0
    %420 = vmatpush.msra.mxu0 %v150
    %421 = vmatpush.msra.mxu0 %v148
    %422 = vmatpush.msra.mxu0 %v146
    %423 = vmatpush.msra.mxu0 %v144
    %424 = vmatmul.f32.gmra.mxu0 %v359
    %v425 = vpop.f32.mrf.mxu0
    %v426 = vadd.f32 0.0, %v425
    %427 = vmatmul.f32.gmra.mxu0 %v406
    %v428 = vpop.f32.mrf.mxu0
    %429 = vdwg.mxu0
    %430 = vmatpush.msra.mxu0 0.0
    %431 = vmatpush.msra.mxu0 0.0
    %432 = vmatpush.msra.mxu0 0.0
    %433 = vmatpush.msra.mxu0 0.0
    %434 = vmatpush.msra.mxu0 0.0
    %435 = vmatpush.msra.mxu0 0.0
    %436 = vmatpush.msra.mxu0 0.0
    %437 = vmatpush.msra.mxu0 0.0
    %438 = vmatpush.msra.mxu0 0.0
    %439 = vmatpush.msra.mxu0 0.0
    %440 = vmatpush.msra.mxu0 0.0
    %441 = vmatpush.msra.mxu0 0.0
    %442 = vmatpush.msra.mxu0 %v151
    %443 = vmatpush.msra.mxu0 %v149
    %444 = vmatpush.msra.mxu0 %v147
    %445 = vmatpush.msra.mxu0 %v145
    %446 = vmatmul.f32.gmra.mxu0 %v359
    %v447 = vpop.f32.mrf.mxu0
    %448 = vmatmul.f32.gmra.mxu0 %v406
    %v449 = vpop.f32.mrf.mxu0
    %v450 = vadd.f32 0.0, %v449
    %451 = vdwg.mxu0
    %v452 = vadd.f32 %v127, %v426
    %v453 = vmul.f32 %v161, %v452
    %v454 = vtanh.pop %v453
    %v455 = vmul.f32 %v161, %v454
    %v456 = vadd.f32 %v455, %v162
    %v457 = vmul.f32 %v456, %v349
    %459 = vrot.lane.b32.xlu0 %v456, 64
    %v460 = vpop.permute.xlu0 %459
    %v462 = vmul.f32 %v456, %v460
    %464 = vrot.lane.b32.xlu0 %v462, 32
    %v465 = vpop.permute.xlu0 %464
    %v467 = vadd.f32 %v457, %v465
    %v468 = vtanh.pop %v467
    %470 = vrot.lane.b32.xlu0 %v468, 64
    %v471 = vpop.permute.xlu0 %470
    %v473 = vmul.f32 %v456, %v471
    %475 = vrot.lane.b32.xlu0 %v473, 32
    %v476 = vpop.permute.xlu0 %475
    %v477 = vsel %vm168, %v476, 0
    %479 = vmatpush.msra.mxu0 0.0
    %480 = vmatpush.msra.mxu0 0.0
    %481 = vmatpush.msra.mxu0 0.0
    %482 = vmatpush.msra.mxu0 0.0
    %483 = vmatpush.msra.mxu0 0.0
    %484 = vmatpush.msra.mxu0 0.0
    %485 = vmatpush.msra.mxu0 0.0
    %486 = vmatpush.msra.mxu0 0.0
    %487 = vmatpush.msra.mxu0 0.0
    %488 = vmatpush.msra.mxu0 0.0
    %489 = vmatpush.msra.mxu0 0.0
    %490 = vmatpush.msra.mxu0 0.0
    %491 = vmatpush.msra.mxu0 %v155
    %492 = vmatpush.msra.mxu0 %v154
    %493 = vmatpush.msra.mxu0 %v153
    %494 = vmatpush.msra.mxu0 %v152
    %495 = vmatmul.f32.gmra.mxu0 %v477
    %v496 = vpop.f32.mrf.mxu0
    %v497 = vadd.f32 %v450, %v496
    %498 = vdwg.mxu0
    %v499 = vmul.f32 %v161, %v497
    %v500 = vadd.f32 %v499, %v167
    %v501 = vtanh.pop %v500
    %v502 = vmul.f32 %v161, %v501
    %v503 = vadd.f32 %v502, %v162
    %v504 = vmul.f32 %v503, %v396
    %506 = vrot.lane.b32.xlu0 %v503, 64
    %v507 = vpop.permute.xlu0 %506
    %v509 = vmul.f32 %v503, %v507
    %511 = vrot.lane.b32.xlu0 %v509, 32
    %v512 = vpop.permute.xlu0 %511
    %v514 = vadd.f32 %v504, %v512
    %v515 = vtanh.pop %v514
    %517 = vrot.lane.b32.xlu0 %v515, 64
    %v518 = vpop.permute.xlu0 %517
    %v520 = vmul.f32 %v503, %v518
    %522 = vrot.lane.b32.xlu0 %v520, 32
    %v523 = vpop.permute.xlu0 %522
    %v524 = vsel %vm168, %v523, 0
    %526 = vmatpush.msra.mxu0 0.0
    %527 = vmatpush.msra.mxu0 0.0
    %528 = vmatpush.msra.mxu0 0.0
    %529 = vmatpush.msra.mxu0 0.0
    %530 = vmatpush.msra.mxu0 0.0
    %531 = vmatpush.msra.mxu0 0.0
    %532 = vmatpush.msra.mxu0 0.0
    %533 = vmatpush.msra.mxu0 0.0
    %534 = vmatpush.msra.mxu0 0.0
    %535 = vmatpush.msra.mxu0 0.0
    %536 = vmatpush.msra.mxu0 0.0
    %537 = vmatpush.msra.mxu0 0.0
    %538 = vmatpush.msra.mxu0 %v150
    %539 = vmatpush.msra.mxu0 %v148
    %540 = vmatpush.msra.mxu0 %v146
    %541 = vmatpush.msra.mxu0 %v144
    %542 = vmatmul.f32.gmra.mxu0 %v477
    %v543 = vpop.f32.mrf.mxu0
    %v544 = vadd.f32 0.0, %v543
    %545 = vmatmul.f32.gmra.mxu0 %v524
    %v546 = vpop.f32.mrf.mxu0
    %547 = vdwg.mxu0
    %548 = vmatpush.msra.mxu0 0.0
    %549 = vmatpush.msra.mxu0 0.0
    %550 = vmatpush.msra.mxu0 0.0
    %551 = vmatpush.msra.mxu0 0.0
    %552 = vmatpush.msra.mxu0 0.0
    %553 = vmatpush.msra.mxu0 0.0
    %554 = vmatpush.msra.mxu0 0.0
    %555 = vmatpush.msra.mxu0 0.0
    %556 = vmatpush.msra.mxu0 0.0
    %557 = vmatpush.msra.mxu0 0.0
    %558 = vmatpush.msra.mxu0 0.0
    %559 = vmatpush.msra.mxu0 0.0
    %560 = vmatpush.msra.mxu0 %v151
    %561 = vmatpush.msra.mxu0 %v149
    %562 = vmatpush.msra.mxu0 %v147
    %563 = vmatpush.msra.mxu0 %v145
    %564 = vmatmul.f32.gmra.mxu0 %v477
    %v565 = vpop.f32.mrf.mxu0
    %566 = vmatmul.f32.gmra.mxu0 %v524
    %v567 = vpop.f32.mrf.mxu0
    %v568 = vadd.f32 0.0, %v567
    %569 = vdwg.mxu0
    %v570 = vadd.f32 %v130, %v544
    %v571 = vmul.f32 %v161, %v570
    %v572 = vtanh.pop %v571
    %v573 = vmul.f32 %v161, %v572
    %v574 = vadd.f32 %v573, %v162
    %v575 = vmul.f32 %v574, %v467
    %577 = vrot.lane.b32.xlu0 %v574, 64
    %v578 = vpop.permute.xlu0 %577
    %v580 = vmul.f32 %v574, %v578
    %582 = vrot.lane.b32.xlu0 %v580, 32
    %v583 = vpop.permute.xlu0 %582
    %v585 = vadd.f32 %v575, %v583
    %v586 = vtanh.pop %v585
    %588 = vrot.lane.b32.xlu0 %v586, 64
    %v589 = vpop.permute.xlu0 %588
    %v591 = vmul.f32 %v574, %v589
    %593 = vrot.lane.b32.xlu0 %v591, 32
    %v594 = vpop.permute.xlu0 %593
    %v595 = vsel %vm168, %v594, 0
    %597 = vmatpush.msra.mxu0 0.0
    %598 = vmatpush.msra.mxu0 0.0
    %599 = vmatpush.msra.mxu0 0.0
    %600 = vmatpush.msra.mxu0 0.0
    %601 = vmatpush.msra.mxu0 0.0
    %602 = vmatpush.msra.mxu0 0.0
    %603 = vmatpush.msra.mxu0 0.0
    %604 = vmatpush.msra.mxu0 0.0
    %605 = vmatpush.msra.mxu0 0.0
    %606 = vmatpush.msra.mxu0 0.0
    %607 = vmatpush.msra.mxu0 0.0
    %608 = vmatpush.msra.mxu0 0.0
    %609 = vmatpush.msra.mxu0 %v155
    %610 = vmatpush.msra.mxu0 %v154
    %611 = vmatpush.msra.mxu0 %v153
    %612 = vmatpush.msra.mxu0 %v152
    %613 = vmatmul.f32.gmra.mxu0 %v595
    %v614 = vpop.f32.mrf.mxu0
    %v615 = vadd.f32 %v568, %v614
    %616 = vdwg.mxu0
    %v617 = vmul.f32 %v161, %v615
    %v618 = vadd.f32 %v617, %v167
    %v619 = vtanh.pop %v618
    %v620 = vmul.f32 %v161, %v619
    %v621 = vadd.f32 %v620, %v162
    %v622 = vmul.f32 %v621, %v514
    %624 = vrot.lane.b32.xlu0 %v621, 64
    %v625 = vpop.permute.xlu0 %624
    %v627 = vmul.f32 %v621, %v625
    %629 = vrot.lane.b32.xlu0 %v627, 32
    %v630 = vpop.permute.xlu0 %629
    %v632 = vadd.f32 %v622, %v630
    %v633 = vtanh.pop %v632
    %635 = vrot.lane.b32.xlu0 %v633, 64
    %v636 = vpop.permute.xlu0 %635
    %v638 = vmul.f32 %v621, %v636
    %640 = vrot.lane.b32.xlu0 %v638, 32
    %v641 = vpop.permute.xlu0 %640
    %v642 = vsel %vm168, %v641, 0
    %644 = vmatpush.msra.mxu0 0.0
    %645 = vmatpush.msra.mxu0 0.0
    %646 = vmatpush.msra.mxu0 0.0
    %647 = vmatpush.msra.mxu0 0.0
    %648 = vmatpush.msra.mxu0 0.0
    %649 = vmatpush.msra.mxu0 0.0
    %650 = vmatpush.msra.mxu0 0.0
    %651 = vmatpush.msra.mxu0 0.0
    %652 = vmatpush.msra.mxu0 0.0
    %653 = vmatpush.msra.mxu0 0.0
    %654 = vmatpush.msra.mxu0 0.0
    %655 = vmatpush.msra.mxu0 0.0
    %656 = vmatpush.msra.mxu0 %v150
    %657 = vmatpush.msra.mxu0 %v148
    %658 = vmatpush.msra.mxu0 %v146
    %659 = vmatpush.msra.mxu0 %v144
    %660 = vmatmul.f32.gmra.mxu0 %v595
    %v661 = vpop.f32.mrf.mxu0
    %v662 = vadd.f32 0.0, %v661
    %663 = vmatmul.f32.gmra.mxu0 %v642
    %v664 = vpop.f32.mrf.mxu0
    %665 = vdwg.mxu0
    %666 = vmatpush.msra.mxu0 0.0
    %667 = vmatpush.msra.mxu0 0.0
    %668 = vmatpush.msra.mxu0 0.0
    %669 = vmatpush.msra.mxu0 0.0
    %670 = vmatpush.msra.mxu0 0.0
    %671 = vmatpush.msra.mxu0 0.0
    %672 = vmatpush.msra.mxu0 0.0
    %673 = vmatpush.msra.mxu0 0.0
    %674 = vmatpush.msra.mxu0 0.0
    %675 = vmatpush.msra.mxu0 0.0
    %676 = vmatpush.msra.mxu0 0.0
    %677 = vmatpush.msra.mxu0 0.0
    %678 = vmatpush.msra.mxu0 %v151
    %679 = vmatpush.msra.mxu0 %v149
    %680 = vmatpush.msra.mxu0 %v147
    %681 = vmatpush.msra.mxu0 %v145
    %682 = vmatmul.f32.gmra.mxu0 %v595
    %v683 = vpop.f32.mrf.mxu0
    %684 = vmatmul.f32.gmra.mxu0 %v642
    %v685 = vpop.f32.mrf.mxu0
    %v686 = vadd.f32 0.0, %v685
    %687 = vdwg.mxu0
    %v688 = vadd.f32 %v133, %v662
    %v689 = vmul.f32 %v161, %v688
    %v690 = vtanh.pop %v689
    %v691 = vmul.f32 %v161, %v690
    %v692 = vadd.f32 %v691, %v162
    %v693 = vmul.f32 %v692, %v585
    %695 = vrot.lane.b32.xlu0 %v692, 64
    %v696 = vpop.permute.xlu0 %695
    %v698 = vmul.f32 %v692, %v696
    %700 = vrot.lane.b32.xlu0 %v698, 32
    %v701 = vpop.permute.xlu0 %700
    %v703 = vadd.f32 %v693, %v701
    %v704 = vtanh.pop %v703
    %706 = vrot.lane.b32.xlu0 %v704, 64
    %v707 = vpop.permute.xlu0 %706
    %v709 = vmul.f32 %v692, %v707
    %711 = vrot.lane.b32.xlu0 %v709, 32
    %v712 = vpop.permute.xlu0 %711
    %v713 = vsel %vm168, %v712, 0
    %715 = vmatpush.msra.mxu0 0.0
    %716 = vmatpush.msra.mxu0 0.0
    %717 = vmatpush.msra.mxu0 0.0
    %718 = vmatpush.msra.mxu0 0.0
    %719 = vmatpush.msra.mxu0 0.0
    %720 = vmatpush.msra.mxu0 0.0
    %721 = vmatpush.msra.mxu0 0.0
    %722 = vmatpush.msra.mxu0 0.0
    %723 = vmatpush.msra.mxu0 0.0
    %724 = vmatpush.msra.mxu0 0.0
    %725 = vmatpush.msra.mxu0 0.0
    %726 = vmatpush.msra.mxu0 0.0
    %727 = vmatpush.msra.mxu0 %v155
    %728 = vmatpush.msra.mxu0 %v154
    %729 = vmatpush.msra.mxu0 %v153
    %730 = vmatpush.msra.mxu0 %v152
    %731 = vmatmul.f32.gmra.mxu0 %v713
    %v732 = vpop.f32.mrf.mxu0
    %v733 = vadd.f32 %v686, %v732
    %734 = vdwg.mxu0
    %v735 = vmul.f32 %v161, %v733
    %v736 = vadd.f32 %v735, %v167
    %v737 = vtanh.pop %v736
    %v738 = vmul.f32 %v161, %v737
    %v739 = vadd.f32 %v738, %v162
    %v740 = vmul.f32 %v739, %v632
    %742 = vrot.lane.b32.xlu0 %v739, 64
    %v743 = vpop.permute.xlu0 %742
    %v745 = vmul.f32 %v739, %v743
    %747 = vrot.lane.b32.xlu0 %v745, 32
    %v748 = vpop.permute.xlu0 %747
    %v750 = vadd.f32 %v740, %v748
    %v751 = vtanh.pop %v750
    %753 = vrot.lane.b32.xlu0 %v751, 64
    %v754 = vpop.permute.xlu0 %753
    %v756 = vmul.f32 %v739, %v754
    %758 = vrot.lane.b32.xlu0 %v756, 32
    %v759 = vpop.permute.xlu0 %758
    %v760 = vsel %vm168, %v759, 0
    %762 = vmatpush.msra.mxu0 0.0
    %763 = vmatpush.msra.mxu0 0.0
    %764 = vmatpush.msra.mxu0 0.0
    %765 = vmatpush.msra.mxu0 0.0
    %766 = vmatpush.msra.mxu0 0.0
    %767 = vmatpush.msra.mxu0 0.0
    %768 = vmatpush.msra.mxu0 0.0
    %769 = vmatpush.msra.mxu0 0.0
    %770 = vmatpush.msra.mxu0 0.0
    %771 = vmatpush.msra.mxu0 0.0
    %772 = vmatpush.msra.mxu0 0.0
    %773 = vmatpush.msra.mxu0 0.0
    %774 = vmatpush.msra.mxu0 %v150
    %775 = vmatpush.msra.mxu0 %v148
    %776 = vmatpush.msra.mxu0 %v146
    %777 = vmatpush.msra.mxu0 %v144
    %778 = vmatmul.f32.gmra.mxu0 %v713
    %v779 = vpop.f32.mrf.mxu0
    %v780 = vadd.f32 0.0, %v779
    %781 = vmatmul.f32.gmra.mxu0 %v760
    %v782 = vpop.f32.mrf.mxu0
    %783 = vdwg.mxu0
    %784 = vmatpush.msra.mxu0 0.0
    %785 = vmatpush.msra.mxu0 0.0
    %786 = vmatpush.msra.mxu0 0.0
    %787 = vmatpush.msra.mxu0 0.0
    %788 = vmatpush.msra.mxu0 0.0
    %789 = vmatpush.msra.mxu0 0.0
    %790 = vmatpush.msra.mxu0 0.0
    %791 = vmatpush.msra.mxu0 0.0
    %792 = vmatpush.msra.mxu0 0.0
    %793 = vmatpush.msra.mxu0 0.0
    %794 = vmatpush.msra.mxu0 0.0
    %795 = vmatpush.msra.mxu0 0.0
    %796 = vmatpush.msra.mxu0 %v151
    %797 = vmatpush.msra.mxu0 %v149
    %798 = vmatpush.msra.mxu0 %v147
    %799 = vmatpush.msra.mxu0 %v145
    %800 = vmatmul.f32.gmra.mxu0 %v713
    %v801 = vpop.f32.mrf.mxu0
    %802 = vmatmul.f32.gmra.mxu0 %v760
    %v803 = vpop.f32.mrf.mxu0
    %v804 = vadd.f32 0.0, %v803
    %805 = vdwg.mxu0
    %v806 = vadd.f32 %v136, %v780
    %v807 = vmul.f32 %v161, %v806
    %v808 = vtanh.pop %v807
    %v809 = vmul.f32 %v161, %v808
    %v810 = vadd.f32 %v809, %v162
    %v811 = vmul.f32 %v810, %v703
    %813 = vrot.lane.b32.xlu0 %v810, 64
    %v814 = vpop.permute.xlu0 %813
    %v816 = vmul.f32 %v810, %v814
    %818 = vrot.lane.b32.xlu0 %v816, 32
    %v819 = vpop.permute.xlu0 %818
    %v821 = vadd.f32 %v811, %v819
    %v822 = vtanh.pop %v821
    %824 = vrot.lane.b32.xlu0 %v822, 64
    %v825 = vpop.permute.xlu0 %824
    %v827 = vmul.f32 %v810, %v825
    %829 = vrot.lane.b32.xlu0 %v827, 32
    %v830 = vpop.permute.xlu0 %829
    %v831 = vsel %vm168, %v830, 0
    %833 = vmatpush.msra.mxu0 0.0
    %834 = vmatpush.msra.mxu0 0.0
    %835 = vmatpush.msra.mxu0 0.0
    %836 = vmatpush.msra.mxu0 0.0
    %837 = vmatpush.msra.mxu0 0.0
    %838 = vmatpush.msra.mxu0 0.0
    %839 = vmatpush.msra.mxu0 0.0
    %840 = vmatpush.msra.mxu0 0.0
    %841 = vmatpush.msra.mxu0 0.0
    %842 = vmatpush.msra.mxu0 0.0
    %843 = vmatpush.msra.mxu0 0.0
    %844 = vmatpush.msra.mxu0 0.0
    %845 = vmatpush.msra.mxu0 %v155
    %846 = vmatpush.msra.mxu0 %v154
    %847 = vmatpush.msra.mxu0 %v153
    %848 = vmatpush.msra.mxu0 %v152
    %849 = vmatmul.f32.gmra.mxu0 %v831
    %v850 = vpop.f32.mrf.mxu0
    %v851 = vadd.f32 %v804, %v850
    %852 = vdwg.mxu0
    %v853 = vmul.f32 %v161, %v851
    %v854 = vadd.f32 %v853, %v167
    %v855 = vtanh.pop %v854
    %v856 = vmul.f32 %v161, %v855
    %v857 = vadd.f32 %v856, %v162
    %v858 = vmul.f32 %v857, %v750
    %860 = vrot.lane.b32.xlu0 %v857, 64
    %v861 = vpop.permute.xlu0 %860
    %v863 = vmul.f32 %v857, %v861
    %865 = vrot.lane.b32.xlu0 %v863, 32
    %v866 = vpop.permute.xlu0 %865
    %v868 = vadd.f32 %v858, %v866
    %v869 = vtanh.pop %v868
    %871 = vrot.lane.b32.xlu0 %v869, 64
    %v872 = vpop.permute.xlu0 %871
    %v874 = vmul.f32 %v857, %v872
    %876 = vrot.lane.b32.xlu0 %v874, 32
    %v877 = vpop.permute.xlu0 %876
    %v878 = vsel %vm168, %v877, 0
    %880 = vmatpush.msra.mxu0 0.0
    %881 = vmatpush.msra.mxu0 0.0
    %882 = vmatpush.msra.mxu0 0.0
    %883 = vmatpush.msra.mxu0 0.0
    %884 = vmatpush.msra.mxu0 0.0
    %885 = vmatpush.msra.mxu0 0.0
    %886 = vmatpush.msra.mxu0 0.0
    %887 = vmatpush.msra.mxu0 0.0
    %888 = vmatpush.msra.mxu0 0.0
    %889 = vmatpush.msra.mxu0 0.0
    %890 = vmatpush.msra.mxu0 0.0
    %891 = vmatpush.msra.mxu0 0.0
    %892 = vmatpush.msra.mxu0 %v150
    %893 = vmatpush.msra.mxu0 %v148
    %894 = vmatpush.msra.mxu0 %v146
    %895 = vmatpush.msra.mxu0 %v144
    %896 = vmatmul.f32.gmra.mxu0 %v831
    %v897 = vpop.f32.mrf.mxu0
    %v898 = vadd.f32 0.0, %v897
    %899 = vmatmul.f32.gmra.mxu0 %v878
    %v900 = vpop.f32.mrf.mxu0
    %901 = vdwg.mxu0
    %902 = vmatpush.msra.mxu0 0.0
    %903 = vmatpush.msra.mxu0 0.0
    %904 = vmatpush.msra.mxu0 0.0
    %905 = vmatpush.msra.mxu0 0.0
    %906 = vmatpush.msra.mxu0 0.0
    %907 = vmatpush.msra.mxu0 0.0
    %908 = vmatpush.msra.mxu0 0.0
    %909 = vmatpush.msra.mxu0 0.0
    %910 = vmatpush.msra.mxu0 0.0
    %911 = vmatpush.msra.mxu0 0.0
    %912 = vmatpush.msra.mxu0 0.0
    %913 = vmatpush.msra.mxu0 0.0
    %914 = vmatpush.msra.mxu0 %v151
    %915 = vmatpush.msra.mxu0 %v149
    %916 = vmatpush.msra.mxu0 %v147
    %917 = vmatpush.msra.mxu0 %v145
    %918 = vmatmul.f32.gmra.mxu0 %v831
    %v919 = vpop.f32.mrf.mxu0
    %920 = vmatmul.f32.gmra.mxu0 %v878
    %v921 = vpop.f32.mrf.mxu0
    %v922 = vadd.f32 0.0, %v921
    %923 = vdwg.mxu0
    %v924 = vadd.f32 %v139, %v898
    %v925 = vmul.f32 %v161, %v924
    %v926 = vtanh.pop %v925
    %v927 = vmul.f32 %v161, %v926
    %v928 = vadd.f32 %v927, %v162
    %v929 = vmul.f32 %v928, %v821
    %931 = vrot.lane.b32.xlu0 %v928, 64
    %v932 = vpop.permute.xlu0 %931
    %v934 = vmul.f32 %v928, %v932
    %936 = vrot.lane.b32.xlu0 %v934, 32
    %v937 = vpop.permute.xlu0 %936
    %v939 = vadd.f32 %v929, %v937
    %v940 = vtanh.pop %v939
    %942 = vrot.lane.b32.xlu0 %v940, 64
    %v943 = vpop.permute.xlu0 %942
    %v945 = vmul.f32 %v928, %v943
    %947 = vrot.lane.b32.xlu0 %v945, 32
    %v948 = vpop.permute.xlu0 %947
    %v949 = vsel %vm168, %v948, 0
    %951 = vmatpush.msra.mxu0 0.0
    %952 = vmatpush.msra.mxu0 0.0
    %953 = vmatpush.msra.mxu0 0.0
    %954 = vmatpush.msra.mxu0 0.0
    %955 = vmatpush.msra.mxu0 0.0
    %956 = vmatpush.msra.mxu0 0.0
    %957 = vmatpush.msra.mxu0 0.0
    %958 = vmatpush.msra.mxu0 0.0
    %959 = vmatpush.msra.mxu0 0.0
    %960 = vmatpush.msra.mxu0 0.0
    %961 = vmatpush.msra.mxu0 0.0
    %962 = vmatpush.msra.mxu0 0.0
    %963 = vmatpush.msra.mxu0 %v155
    %964 = vmatpush.msra.mxu0 %v154
    %965 = vmatpush.msra.mxu0 %v153
    %966 = vmatpush.msra.mxu0 %v152
    %967 = vmatmul.f32.gmra.mxu0 %v949
    %v968 = vpop.f32.mrf.mxu0
    %v969 = vadd.f32 %v922, %v968
    %970 = vdwg.mxu0
    %v971 = vmul.f32 %v161, %v969
    %v972 = vadd.f32 %v971, %v167
    %v973 = vtanh.pop %v972
    %v974 = vmul.f32 %v161, %v973
    %v975 = vadd.f32 %v974, %v162
    %v976 = vmul.f32 %v975, %v868
    %978 = vrot.lane.b32.xlu0 %v975, 64
    %v979 = vpop.permute.xlu0 %978
    %v981 = vmul.f32 %v975, %v979
    %983 = vrot.lane.b32.xlu0 %v981, 32
    %v984 = vpop.permute.xlu0 %983
    %v986 = vadd.f32 %v976, %v984
    %v987 = vtanh.pop %v986
    %989 = vrot.lane.b32.xlu0 %v987, 64
    %v990 = vpop.permute.xlu0 %989
    %v992 = vmul.f32 %v975, %v990
    %994 = vrot.lane.b32.xlu0 %v992, 32
    %v995 = vpop.permute.xlu0 %994
    %v996 = vsel %vm168, %v995, 0
    %998 = vmatpush.msra.mxu0 0.0
    %999 = vmatpush.msra.mxu0 0.0
    %1000 = vmatpush.msra.mxu0 0.0
    %1001 = vmatpush.msra.mxu0 0.0
    %1002 = vmatpush.msra.mxu0 0.0
    %1003 = vmatpush.msra.mxu0 0.0
    %1004 = vmatpush.msra.mxu0 0.0
    %1005 = vmatpush.msra.mxu0 0.0
    %1006 = vmatpush.msra.mxu0 0.0
    %1007 = vmatpush.msra.mxu0 0.0
    %1008 = vmatpush.msra.mxu0 0.0
    %1009 = vmatpush.msra.mxu0 0.0
    %1010 = vmatpush.msra.mxu0 %v150
    %1011 = vmatpush.msra.mxu0 %v148
    %1012 = vmatpush.msra.mxu0 %v146
    %1013 = vmatpush.msra.mxu0 %v144
    %1014 = vmatmul.f32.gmra.mxu0 %v949
    %v1015 = vpop.f32.mrf.mxu0
    %v1016 = vadd.f32 0.0, %v1015
    %1017 = vmatmul.f32.gmra.mxu0 %v996
    %v1018 = vpop.f32.mrf.mxu0
    %1019 = vdwg.mxu0
    %1020 = vmatpush.msra.mxu0 0.0
    %1021 = vmatpush.msra.mxu0 0.0
    %1022 = vmatpush.msra.mxu0 0.0
    %1023 = vmatpush.msra.mxu0 0.0
    %1024 = vmatpush.msra.mxu0 0.0
    %1025 = vmatpush.msra.mxu0 0.0
    %1026 = vmatpush.msra.mxu0 0.0
    %1027 = vmatpush.msra.mxu0 0.0
    %1028 = vmatpush.msra.mxu0 0.0
    %1029 = vmatpush.msra.mxu0 0.0
    %1030 = vmatpush.msra.mxu0 0.0
    %1031 = vmatpush.msra.mxu0 0.0
    %1032 = vmatpush.msra.mxu0 %v151
    %1033 = vmatpush.msra.mxu0 %v149
    %1034 = vmatpush.msra.mxu0 %v147
    %1035 = vmatpush.msra.mxu0 %v145
    %1036 = vmatmul.f32.gmra.mxu0 %v949
    %v1037 = vpop.f32.mrf.mxu0
    %1038 = vmatmul.f32.gmra.mxu0 %v996
    %v1039 = vpop.f32.mrf.mxu0
    %v1040 = vadd.f32 0.0, %v1039
    %1041 = vdwg.mxu0
    %v1042 = vadd.f32 %v142, %v1016
    %v1043 = vmul.f32 %v161, %v1042
    %v1044 = vtanh.pop %v1043
    %v1045 = vmul.f32 %v161, %v1044
    %v1046 = vadd.f32 %v1045, %v162
    %v1047 = vmul.f32 %v1046, %v939
    %1049 = vrot.lane.b32.xlu0 %v1046, 64
    %v1050 = vpop.permute.xlu0 %1049
    %v1052 = vmul.f32 %v1046, %v1050
    %1054 = vrot.lane.b32.xlu0 %v1052, 32
    %v1055 = vpop.permute.xlu0 %1054
    %v1057 = vadd.f32 %v1047, %v1055
    %v1058 = vtanh.pop %v1057
    %1060 = vrot.lane.b32.xlu0 %v1058, 64
    %v1061 = vpop.permute.xlu0 %1060
    %v1063 = vmul.f32 %v1046, %v1061
    %1065 = vrot.lane.b32.xlu0 %v1063, 32
    %v1066 = vpop.permute.xlu0 %1065
    %v1067 = vsel %vm168, %v1066, 0
    %1069 = vmatpush.msra.mxu0 0.0
    %1070 = vmatpush.msra.mxu0 0.0
    %1071 = vmatpush.msra.mxu0 0.0
    %1072 = vmatpush.msra.mxu0 0.0
    %1073 = vmatpush.msra.mxu0 0.0
    %1074 = vmatpush.msra.mxu0 0.0
    %1075 = vmatpush.msra.mxu0 0.0
    %1076 = vmatpush.msra.mxu0 0.0
    %1077 = vmatpush.msra.mxu0 0.0
    %1078 = vmatpush.msra.mxu0 0.0
    %1079 = vmatpush.msra.mxu0 0.0
    %1080 = vmatpush.msra.mxu0 0.0
    %1081 = vmatpush.msra.mxu0 %v155
    %1082 = vmatpush.msra.mxu0 %v154
    %1083 = vmatpush.msra.mxu0 %v153
    %1084 = vmatpush.msra.mxu0 %v152
    %1085 = vmatmul.f32.gmra.mxu0 %v1067
    %v1086 = vpop.f32.mrf.mxu0
    %v1087 = vadd.f32 %v1040, %v1086
    %1088 = vdwg.mxu0
    %v1089 = vmul.f32 %v161, %v1087
    %v1090 = vadd.f32 %v1089, %v167
    %v1091 = vtanh.pop %v1090
    %v1092 = vmul.f32 %v161, %v1091
    %v1093 = vadd.f32 %v1092, %v162
    %v1094 = vmul.f32 %v1093, %v986
    %1096 = vrot.lane.b32.xlu0 %v1093, 64
    %v1097 = vpop.permute.xlu0 %1096
    %v1099 = vmul.f32 %v1093, %v1097
    %1101 = vrot.lane.b32.xlu0 %v1099, 32
    %v1102 = vpop.permute.xlu0 %1101
    %v1104 = vadd.f32 %v1094, %v1102
    %v1105 = vtanh.pop %v1104
    %1107 = vrot.lane.b32.xlu0 %v1105, 64
    %v1108 = vpop.permute.xlu0 %1107
    %v1110 = vmul.f32 %v1093, %v1108
    %v1111 = vld [vmem:[#allocation6] sm:$0xff]
    %v1112 = vld [vmem:[#allocation6 + $0x8] sm:$0xff]
    %v1113 = vld [vmem:[#allocation6 + $0x10] sm:$0xff]
    %v1114 = vld [vmem:[#allocation6 + $0x18] sm:$0xff]
    %v1115 = vld [vmem:[#allocation2] sm:$0x1]
    %v1117 = vperm.slane %v1115, 0
    %1118 = vset.pattern.permute.xlu0 0
    %1119 = vperm.xlu0 %1118, %v1117
    %v1120 = vpop.permute.xlu0 %1119
    %1123 = vrot.lane.b32.xlu0 %v1110, 32
    %v1124 = vpop.permute.xlu0 %1123
    %v1125 = vsel %vm168, %v1124, 0
    %1127 = vmatpush.msra.mxu0 0.0
    %1128 = vmatpush.msra.mxu0 0.0
    %1129 = vmatpush.msra.mxu0 0.0
    %1130 = vmatpush.msra.mxu0 0.0
    %1131 = vmatpush.msra.mxu0 0.0
    %1132 = vmatpush.msra.mxu0 0.0
    %1133 = vmatpush.msra.mxu0 0.0
    %1134 = vmatpush.msra.mxu0 0.0
    %1135 = vmatpush.msra.mxu0 0.0
    %1136 = vmatpush.msra.mxu0 0.0
    %1137 = vmatpush.msra.mxu0 0.0
    %1138 = vmatpush.msra.mxu0 0.0
    %1139 = vmatpush.msra.mxu0 %v1114
    %1140 = vmatpush.msra.mxu0 %v1113
    %1141 = vmatpush.msra.mxu0 %v1112
    %1142 = vmatpush.msra.mxu0 %v1111
    %1143 = vmatmul.f32.gmra.mxu0 %v1125
    %v1144 = vpop.f32.mrf.mxu0
    %v1145 = vadd.f32 %v1120, %v1144
    %1146 = vdwg.mxu0
    %1147 = vst [vmem:[#allocation8] sm:$0xff] %v1145
    // Predicated region
    $region42: #{tpu_custom_call.1} parent=1 // pred_check
      _
    $region43: #{tpu_custom_call.1} parent=1 // pred_check_branch
      %1149 = sbr.rel (0) target = $region45
    $region44: #{tpu_custom_call.1} parent=1 // pred_region
      %1151 = vsyncadd [#allocation5], 0
      %s1153 = sshll.u32 [#allocation8], 4
      %s1154 = int_to_ptr.vmem [resolvable:$true] %s1153
      %s1155 = sshll.u32 %s8, 4
      %s1156 = int_to_ptr.hbm [resolvable:$true] %s1155
      %1158 = dma.vmem_to_hbm [thread:$0]  %s1154, 128, %s1156, [#allocation5]
    $region45: #{tpu_custom_call.1} parent=1 // pred_fallthru
      _
    // Predicated region
    $region46: #{tpu_custom_call.1} parent=1 // pred_check
      _
    $region47: #{tpu_custom_call.1} parent=1 // pred_check_branch
      %1160 = sbr.rel (0) target = $region49
    $region48: #{tpu_custom_call.1} parent=1 // pred_region
      %1162 = dma.done [#allocation5], 128
    $region49: #{tpu_custom_call.1} parent=1 // pred_fallthru
      _
    %1163 = vsyncpa [#allocation4], 1
    %1164 = vsyncpa [#allocation7], 1
    %1165 = vsyncpa [#allocation5], 1

</llo_original>
